<compile_context>
chip_gen: v5e
topology: v5e:2x2
jax: 0.10.0
libtpu: 0.0.40
codegen_flags: <defaults>
</compile_context>

<pallas_src>
import jax
import jax.numpy as jnp
from jax import lax
from jax.experimental import pallas as pl
from jax.experimental.pallas import tpu as pltpu


HID = 300   # hidden width of `network`
KZ = 64     # z feature dim (concat with 64-d xEncoding -> 128 in the original)


# ----------------------------------------------------------------------------
# Kernel factory: per ray-block tile, run layer-1 (z half + hoisted per-ray
# term), layers 2-3, and layer 4 with fused softplus/sigmoid output.
# ----------------------------------------------------------------------------
def _make_kernel(rays_per_tile, n_samples):
    R = rays_per_tile
    nM = n_samples

    def kernel(
        h1x_ref,   # (R, 300)   f32   per-ray  xEnc @ W1x + b1   (hoisted)
        z_ref,     # (TM, 64)   f32/bf16  per-sample z rows (TM = R * nM)
        w1z_ref,   # (64, 300)  bf16  network[0] weight, z half
        w2_ref,    # (300, 300) bf16
        b2_ref,    # (1, 300)   f32
        w3_ref,    # (300, 300) bf16
        b3_ref,    # (1, 300)   f32
        w4_ref,    # (300, 4)   bf16
        b4_ref,    # (1, 4)     f32
        out_ref,   # (TM, 4)    f32   col 0 = sigma (softplus), cols 1:4 = sigmoid
        acc_ref,   # (TM, 300)  f32   VMEM scratch accumulator
    ):
        f32 = jnp.float32
        bf16 = jnp.bfloat16

        # ---- layer 1: z @ W1z (f32 acc) + per-ray (xEnc @ W1x + b1) ----------
        z = z_ref[...].astype(bf16)          # no-op if z already arrives as bf16
        acc_ref[...] = jnp.dot(z, w1z_ref[...], preferred_element_type=f32)
        # Broadcast each ray's pre-activation row onto its nM sample rows.
        # Static row-block slices + (1,300) broadcast add (same as a bias add).
        for r in range(R):
            sl = slice(r * nM, (r + 1) * nM)
            acc_ref[sl, :] = acc_ref[sl, :] + h1x_ref[r:r + 1, :]
        # cast-then-ReLU: activation lives as bf16 between layers
        h = jnp.maximum(acc_ref[...].astype(bf16), 0.0)

        # ---- layer 2 ---------------------------------------------------------
        h = jnp.dot(h, w2_ref[...], preferred_element_type=f32) + b2_ref[...]
        h = jnp.maximum(h.astype(bf16), 0.0)

        # ---- layer 3 ---------------------------------------------------------
        h = jnp.dot(h, w3_ref[...], preferred_element_type=f32) + b3_ref[...]
        h = jnp.maximum(h.astype(bf16), 0.0)

        # ---- layer 4 + fused output activations ------------------------------
        out = jnp.dot(h, w4_ref[...], preferred_element_type=f32) + b4_ref[...]
        col = lax.broadcasted_iota(jnp.int32, out.shape, 1)
        out_ref[...] = jnp.where(col == 0, jax.nn.softplus(out),
                                 jax.nn.sigmoid(out))

    return kernel


# ----------------------------------------------------------------------------
# Tile selection: R whole rays per grid step, targeting ~target_rows sample
# rows.  R must be a multiple of 8 (sublane tiling of the h1x block) or equal
# to N; R is capped to keep the in-kernel broadcast loop a short static unroll.
# ----------------------------------------------------------------------------
def _choose_rays_per_tile(n_rays, n_samples, target_rows, max_unroll=128):
    r_cap = max(1, min(target_rows // max(n_samples, 1), max_unroll))
    if n_rays <= r_cap:
        return n_rays                     # single/partial-coverage: block dim == N
    if r_cap >= 8:
        return (r_cap // 8) * 8           # sublane-aligned ray block
    return min(8, n_rays)                 # tiny rays-per-tile budget: round up to 8


# ----------------------------------------------------------------------------
# Wrapper
# ----------------------------------------------------------------------------
def nerf2_forward(x, z, params, *, target_rows=2048):
    """x: (N, 3) f32, z: (N, nM, 64) f32 or bf16 -> (sigma (N,nM,1), c (N,nM,3)) f32.

    target_rows is the row-tile target (sweep 1024-2048; 2048 default).
    For best megacore balance on v7x keep the number of ray-blocks >= 2.
    """
    N = x.shape[0]
    _, nM, k = z.shape
    assert k == KZ, "z feature dim must be 64 (concat with 64-dim xEncoding -> 128)"
    M = N * nM

    f32, bf16 = jnp.float32, jnp.bfloat16

    # --- hoisted per-ray path (tiny, plain JAX; done once per ray, not per sample)
    xenc = jax.nn.relu(x.astype(f32) @ params["wx"] + params["bx"])   # (N, 64) f32
    h1x = xenc @ params["w1x"] + params["b1"]                         # (N, 300) f32

    # free contiguous reshape; dtype preserved (kernel casts to bf16 if needed)
    z_flat = z.reshape(M, k)

    R = _choose_rays_per_tile(N, nM, target_rows)
    TM = R * nM
    grid_m = pl.cdiv(N, R)

    # --- weights: bf16 for the MXU; biases stay f32 (added to the f32 acc) ---
    w1z = params["w1z"].astype(bf16)
    w2 = params["w2"].astype(bf16)
    w3 = params["w3"].astype(bf16)
    w4 = params["w4"].astype(bf16)
    weight_args = (w1z, w2, params["b2"], w3, params["b3"], w4, params["b4"])

    def full_spec(a):
        return pl.BlockSpec(a.shape, lambda i: (0, 0))

    in_specs = [
        pl.BlockSpec((R, HID), lambda i: (i, 0)),   # per-ray h1x tile (f32)
        pl.BlockSpec((TM, k), lambda i: (i, 0)),    # z sample tile
    ] + [full_spec(a) for a in weight_args]

    out_specs = pl.BlockSpec((TM, 4), lambda i: (i, 0))
    out_shape = jax.ShapeDtypeStruct((M, 4), f32)

    # advisory cost hint for XLA scheduling around the custom call
    flops = 2 * M * (KZ * HID + 2 * HID * HID + HID * 4)
    bytes_accessed = (
        M * k * z.dtype.itemsize        # z
        + N * HID * 4                   # per-ray h1x (f32)
        + M * 4 * 4                     # output (f32)
        + 2 * (KZ * HID + 2 * HID * HID + HID * 4)   # bf16 weights
        + 4 * (2 * HID + 4)                          # f32 biases
    )

    out4 = pl.pallas_call(
        _make_kernel(R, nM),
        grid=(grid_m,),
        in_specs=in_specs,
        out_specs=out_specs,
        out_shape=out_shape,
        scratch_shapes=[pltpu.VMEM((TM, HID), f32)],
        compiler_params=pltpu.CompilerParams(
            dimension_semantics=("parallel",),
            # explicit scoped-VMEM budget; safe on v5e/v6e (128 MiB) and v7x (64 MiB)
            vmem_limit_bytes=32 * 1024 * 1024,
        ),
        cost_estimate=pl.CostEstimate(
            flops=flops, transcendentals=5 * M, bytes_accessed=bytes_accessed),
    )(h1x, z_flat, *weight_args)

    sigma = out4[:, 0:1].reshape(N, nM, 1)
    c = out4[:, 1:4].reshape(N, nM, 3)
    return sigma, c


# ----------------------------------------------------------------------------
# Deterministic parameter init (mimics torch.nn.Linear default init:
# U(-1/sqrt(fan_in), 1/sqrt(fan_in)) for weight and bias). Stored in f32;
# the forward wrapper casts the matmul weights to bf16.
# ----------------------------------------------------------------------------
def init_params(key):
    def linear(key, fan_in, fan_out):
        kw, kb = jax.random.split(key)
        bound = 1.0 / jnp.sqrt(fan_in)
        w = jax.random.uniform(kw, (fan_in, fan_out), jnp.float32, -bound, bound)
        b = jax.random.uniform(kb, (1, fan_out), jnp.float32, -bound, bound)
        return w, b

    keys = jax.random.split(key, 5)
    wx, bx = linear(keys[0], 3, 64)           # xLayer
    w1, b1 = linear(keys[1], 128, 300)        # network[0]
    w2, b2 = linear(keys[2], 300, 300)        # network[2]
    w3, b3 = linear(keys[3], 300, 300)        # network[4]
    w4, b4 = linear(keys[4], 300, 4)          # network[6]

    return {
        "wx": wx, "bx": bx,
        "w1x": w1[:64], "w1z": w1[64:], "b1": b1,
        "w2": w2, "b2": b2,
        "w3": w3, "b3": b3,
        "w4": w4, "b4": b4,
    }


# ----------------------------------------------------------------------------
# Plain-JAX f32 reference (mirrors the PyTorch forward) for a sanity check.
# ----------------------------------------------------------------------------
def nerf2_reference(x, z, params):
    N = x.shape[0]
    _, nM, k = z.shape
    xenc = jax.nn.relu(x @ params["wx"] + params["bx"])            # (N, 64)
    xenc = jnp.broadcast_to(xenc[:, None, :], (N, nM, 64)).reshape(N * nM, 64)
    zf = z.reshape(N * nM, k)
    w1 = jnp.concatenate([params["w1x"], params["w1z"]], axis=0)   # (128, 300)
    h = jax.nn.relu(jnp.concatenate([xenc, zf], axis=1) @ w1 + params["b1"])
    h = jax.nn.relu(h @ params["w2"] + params["b2"])
    h = jax.nn.relu(h @ params["w3"] + params["b3"])
    out = h @ params["w4"] + params["b4"]
    sigma = jax.nn.softplus(out[:, 0:1]).reshape(N, nM, 1)  # sigmaActivation='softplus'
    c = jax.nn.sigmoid(out[:, 1:]).reshape(N, nM, 3)
    return sigma, c


if __name__ == "__main__":
    key = jax.random.PRNGKey(0)
    kp, kx, kz = jax.random.split(key, 3)

    N, nM, k = 2, 8, 64
    params = init_params(kp)
    x = jax.random.normal(kx, (N, 3), jnp.float32)
    z = jax.random.normal(kz, (N, nM, k), jnp.float32)

    sigma, c = nerf2_forward(x, z, params)
    jax.block_until_ready((sigma, c))

    sigma_ref, c_ref = nerf2_reference(x, z, params)
    assert sigma.shape == (N, nM, 1) and c.shape == (N, nM, 3)
    # bf16 MXU path: tolerance relaxed vs. an all-f32 kernel.
    assert jnp.allclose(sigma, sigma_ref, atol=3e-2, rtol=3e-2)
    assert jnp.allclose(c, c_ref, atol=3e-2, rtol=3e-2)

    print("KERNEL_OK")
</pallas_src>

<mosaic_0001>
module attributes {stable_mosaic.version = 11 : i64} {
  func.func @kernel(%arg0: i32, %arg1: memref<2x300xf32, #tpu.memory_space<vmem>>, %arg2: memref<16x64xf32, #tpu.memory_space<vmem>>, %arg3: memref<64x300xbf16, #tpu.memory_space<vmem>>, %arg4: memref<300x300xbf16, #tpu.memory_space<vmem>>, %arg5: memref<1x300xf32, #tpu.memory_space<vmem>>, %arg6: memref<300x300xbf16, #tpu.memory_space<vmem>>, %arg7: memref<1x300xf32, #tpu.memory_space<vmem>>, %arg8: memref<300x4xbf16, #tpu.memory_space<vmem>>, %arg9: memref<1x4xf32, #tpu.memory_space<vmem>>, %arg10: memref<16x4xf32, #tpu.memory_space<vmem>>, %arg11: memref<16x300xf32, #tpu.memory_space<vmem>>) attributes {dimension_semantics = [#tpu.dimension_semantics<parallel>], iteration_bounds = array<i64: 1>, scalar_prefetch = 0 : i64, scratch_operands = 1 : i64, tpu.core_type = #tpu.core_type<tc>, window_params = [{transform_indices = @transform_0, window_bounds = array<i64: 2, 300>}, {transform_indices = @transform_1, window_bounds = array<i64: 16, 64>}, {pipeline_mode = #tpu.pipeline_mode<synchronous>, transform_indices = @transform_2, window_bounds = array<i64: 64, 300>}, {pipeline_mode = #tpu.pipeline_mode<synchronous>, transform_indices = @transform_3, window_bounds = array<i64: 300, 300>}, {pipeline_mode = #tpu.pipeline_mode<synchronous>, transform_indices = @transform_4, window_bounds = array<i64: 1, 300>}, {pipeline_mode = #tpu.pipeline_mode<synchronous>, transform_indices = @transform_5, window_bounds = array<i64: 300, 300>}, {pipeline_mode = #tpu.pipeline_mode<synchronous>, transform_indices = @transform_6, window_bounds = array<i64: 1, 300>}, {pipeline_mode = #tpu.pipeline_mode<synchronous>, transform_indices = @transform_7, window_bounds = array<i64: 300, 4>}, {pipeline_mode = #tpu.pipeline_mode<synchronous>, transform_indices = @transform_8, window_bounds = array<i64: 1, 4>}, {transform_indices = @transform_9, window_bounds = array<i64: 16, 4>}]} {
    %c0 = arith.constant 0 : index
    %c0_0 = arith.constant 0 : index
    %0 = vector.load %arg2[%c0, %c0_0] : memref<16x64xf32, #tpu.memory_space<vmem>>, vector<16x64xf32>
    %1 = arith.truncf %0 : vector<16x64xf32> to vector<16x64xbf16>
    %c0_1 = arith.constant 0 : index
    %c0_2 = arith.constant 0 : index
    %2 = vector.load %arg3[%c0_1, %c0_2] : memref<64x300xbf16, #tpu.memory_space<vmem>>, vector<64x300xbf16>
    %cst = arith.constant dense<0.000000e+00> : vector<16x300xf32>
    %3 = tpu.matmul %1, %2, %cst {dimension_numbers = #tpu.dot_dimension_numbers<[1], [0], [0], [1], [0, 0, 1, 1], [], []>} : vector<16x64xbf16>, vector<64x300xbf16>, vector<16x300xf32> -> vector<16x300xf32>
    %c0_3 = arith.constant 0 : index
    %c0_4 = arith.constant 0 : index
    %4 = vector.load %arg11[%c0_3, %c0_4] : memref<16x300xf32, #tpu.memory_space<vmem>>, vector<16x300xf32>
    tpu.vector_store %arg11[%c0_3, %c0_4], %3 {strides = array<i32>} : memref<16x300xf32, #tpu.memory_space<vmem>>, vector<16x300xf32>,
    %c0_5 = arith.constant 0 : index
    %c0_6 = arith.constant 0 : index
    %5 = vector.load %arg11[%c0_5, %c0_6] : memref<16x300xf32, #tpu.memory_space<vmem>>, vector<8x300xf32>
    %c0_7 = arith.constant 0 : index
    %c0_8 = arith.constant 0 : index
    %6 = vector.load %arg1[%c0_7, %c0_8] : memref<2x300xf32, #tpu.memory_space<vmem>>, vector<1x300xf32>
    %7 = vector.broadcast %6 : vector<1x300xf32> to vector<8x300xf32>
    %8 = arith.addf %5, %7 : vector<8x300xf32>
    %c0_9 = arith.constant 0 : index
    %c0_10 = arith.constant 0 : index
    %9 = vector.load %arg11[%c0_9, %c0_10] : memref<16x300xf32, #tpu.memory_space<vmem>>, vector<8x300xf32>
    tpu.vector_store %arg11[%c0_9, %c0_10], %8 {strides = array<i32>} : memref<16x300xf32, #tpu.memory_space<vmem>>, vector<8x300xf32>,
    %c8 = arith.constant 8 : index
    %c0_11 = arith.constant 0 : index
    %10 = vector.load %arg11[%c8, %c0_11] : memref<16x300xf32, #tpu.memory_space<vmem>>, vector<8x300xf32>
    %c1 = arith.constant 1 : index
    %c0_12 = arith.constant 0 : index
    %11 = vector.load %arg1[%c1, %c0_12] : memref<2x300xf32, #tpu.memory_space<vmem>>, vector<1x300xf32>
    %12 = vector.broadcast %11 : vector<1x300xf32> to vector<8x300xf32>
    %13 = arith.addf %10, %12 : vector<8x300xf32>
    %c8_13 = arith.constant 8 : index
    %c0_14 = arith.constant 0 : index
    %14 = vector.load %arg11[%c8_13, %c0_14] : memref<16x300xf32, #tpu.memory_space<vmem>>, vector<8x300xf32>
    tpu.vector_store %arg11[%c8_13, %c0_14], %13 {strides = array<i32>} : memref<16x300xf32, #tpu.memory_space<vmem>>, vector<8x300xf32>,
    %c0_15 = arith.constant 0 : index
    %c0_16 = arith.constant 0 : index
    %15 = vector.load %arg11[%c0_15, %c0_16] : memref<16x300xf32, #tpu.memory_space<vmem>>, vector<16x300xf32>
    %16 = arith.truncf %15 : vector<16x300xf32> to vector<16x300xbf16>
    %cst_17 = arith.constant 0.000000e+00 : bf16
    %17 = vector.broadcast %cst_17 : bf16 to vector<16x300xbf16>
    %18 = arith.maximumf %16, %17 : vector<16x300xbf16>
    %c0_18 = arith.constant 0 : index
    %c0_19 = arith.constant 0 : index
    %19 = vector.load %arg4[%c0_18, %c0_19] : memref<300x300xbf16, #tpu.memory_space<vmem>>, vector<300x300xbf16>
    %cst_20 = arith.constant dense<0.000000e+00> : vector<16x300xf32>
    %20 = tpu.matmul %18, %19, %cst_20 {dimension_numbers = #tpu.dot_dimension_numbers<[1], [0], [0], [1], [0, 0, 1, 1], [], []>} : vector<16x300xbf16>, vector<300x300xbf16>, vector<16x300xf32> -> vector<16x300xf32>
    %c0_21 = arith.constant 0 : index
    %c0_22 = arith.constant 0 : index
    %21 = vector.load %arg5[%c0_21, %c0_22] : memref<1x300xf32, #tpu.memory_space<vmem>>, vector<1x300xf32>
    %22 = vector.broadcast %21 : vector<1x300xf32> to vector<16x300xf32>
    %23 = arith.addf %20, %22 : vector<16x300xf32>
    %24 = arith.truncf %23 : vector<16x300xf32> to vector<16x300xbf16>
    %cst_23 = arith.constant 0.000000e+00 : bf16
    %25 = vector.broadcast %cst_23 : bf16 to vector<16x300xbf16>
    %26 = arith.maximumf %24, %25 : vector<16x300xbf16>
    %c0_24 = arith.constant 0 : index
    %c0_25 = arith.constant 0 : index
    %27 = vector.load %arg6[%c0_24, %c0_25] : memref<300x300xbf16, #tpu.memory_space<vmem>>, vector<300x300xbf16>
    %cst_26 = arith.constant dense<0.000000e+00> : vector<16x300xf32>
    %28 = tpu.matmul %26, %27, %cst_26 {dimension_numbers = #tpu.dot_dimension_numbers<[1], [0], [0], [1], [0, 0, 1, 1], [], []>} : vector<16x300xbf16>, vector<300x300xbf16>, vector<16x300xf32> -> vector<16x300xf32>
    %c0_27 = arith.constant 0 : index
    %c0_28 = arith.constant 0 : index
    %29 = vector.load %arg7[%c0_27, %c0_28] : memref<1x300xf32, #tpu.memory_space<vmem>>, vector<1x300xf32>
    %30 = vector.broadcast %29 : vector<1x300xf32> to vector<16x300xf32>
    %31 = arith.addf %28, %30 : vector<16x300xf32>
    %32 = arith.truncf %31 : vector<16x300xf32> to vector<16x300xbf16>
    %cst_29 = arith.constant 0.000000e+00 : bf16
    %33 = vector.broadcast %cst_29 : bf16 to vector<16x300xbf16>
    %34 = arith.maximumf %32, %33 : vector<16x300xbf16>
    %c0_30 = arith.constant 0 : index
    %c0_31 = arith.constant 0 : index
    %35 = vector.load %arg8[%c0_30, %c0_31] : memref<300x4xbf16, #tpu.memory_space<vmem>>, vector<300x4xbf16>
    %cst_32 = arith.constant dense<0.000000e+00> : vector<16x4xf32>
    %36 = tpu.matmul %34, %35, %cst_32 {dimension_numbers = #tpu.dot_dimension_numbers<[1], [0], [0], [1], [0, 0, 1, 1], [], []>} : vector<16x300xbf16>, vector<300x4xbf16>, vector<16x4xf32> -> vector<16x4xf32>
    %c0_33 = arith.constant 0 : index
    %c0_34 = arith.constant 0 : index
    %37 = vector.load %arg9[%c0_33, %c0_34] : memref<1x4xf32, #tpu.memory_space<vmem>>, vector<1x4xf32>
    %38 = vector.broadcast %37 : vector<1x4xf32> to vector<16x4xf32>
    %39 = arith.addf %36, %38 : vector<16x4xf32>
    %40 = tpu.iota {dimensions = array<i32: 1>} : vector<16x4xi32>
    %c0_i32 = arith.constant 0 : i32
    %41 = vector.broadcast %c0_i32 : i32 to vector<16x4xi32>
    %42 = arith.cmpi eq, %40, %41 : vector<16x4xi32>
    %cst_35 = arith.constant 0.000000e+00 : f32
    %43 = vector.broadcast %cst_35 : f32 to vector<16x4xf32>
    %44 = arith.maximumf %39, %43 : vector<16x4xf32>
    %45 = vector.broadcast %cst_35 : f32 to vector<16x4xf32>
    %46 = arith.subf %39, %45 : vector<16x4xf32>
    %47 = arith.cmpf one, %46, %46 : vector<16x4xf32>
    %48 = vector.broadcast %cst_35 : f32 to vector<16x4xf32>
    %49 = arith.addf %39, %48 : vector<16x4xf32>
    %50 = math.absf %46 : vector<16x4xf32>
    %cst_36 = arith.constant 0.000000e+00 : f32
    %51 = vector.broadcast %cst_36 : f32 to vector<16x4xf32>
    %52 = arith.subf %51, %50 : vector<16x4xf32>
    %53 = math.exp %52 : vector<16x4xf32>
    %54 = math.log1p %53 : vector<16x4xf32>
    %55 = arith.addf %44, %54 : vector<16x4xf32>
    %56 = arith.select %47, %49, %55 : vector<16x4xi1>, vector<16x4xf32>
    %57 = arith.negf %39 : vector<16x4xf32>
    %58 = math.exp %57 : vector<16x4xf32>
    %cst_37 = arith.constant 1.000000e+00 : f32
    %59 = vector.broadcast %cst_37 : f32 to vector<16x4xf32>
    %60 = arith.addf %59, %58 : vector<16x4xf32>
    %61 = arith.divf %59, %60 : vector<16x4xf32>
    %62 = arith.select %42, %56, %61 : vector<16x4xi1>, vector<16x4xf32>
    %c0_38 = arith.constant 0 : index
    %c0_39 = arith.constant 0 : index
    %63 = vector.load %arg10[%c0_38, %c0_39] : memref<16x4xf32, #tpu.memory_space<vmem>>, vector<16x4xf32>
    tpu.vector_store %arg10[%c0_38, %c0_39], %62 {strides = array<i32>} : memref<16x4xf32, #tpu.memory_space<vmem>>, vector<16x4xf32>,
    return
  }
  func.func @transform_0(%arg0: i32) -> (i32, i32) {
    %c0_i32 = arith.constant 0 : i32
    %c0_i32_0 = arith.constant 0 : i32
    return %arg0, %c0_i32 : i32, i32
  }
  func.func @transform_1(%arg0: i32) -> (i32, i32) {
    %c0_i32 = arith.constant 0 : i32
    %c0_i32_0 = arith.constant 0 : i32
    return %arg0, %c0_i32 : i32, i32
  }
  func.func @transform_2(%arg0: i32) -> (i32, i32) {
    %c0_i32 = arith.constant 0 : i32
    %c0_i32_0 = arith.constant 0 : i32
    %c0_i32_1 = arith.constant 0 : i32
    return %c0_i32, %c0_i32_0 : i32, i32
  }
  func.func @transform_3(%arg0: i32) -> (i32, i32) {
    %c0_i32 = arith.constant 0 : i32
    %c0_i32_0 = arith.constant 0 : i32
    %c0_i32_1 = arith.constant 0 : i32
    return %c0_i32, %c0_i32_0 : i32, i32
  }
  func.func @transform_4(%arg0: i32) -> (i32, i32) {
    %c0_i32 = arith.constant 0 : i32
    %c0_i32_0 = arith.constant 0 : i32
    %c0_i32_1 = arith.constant 0 : i32
    return %c0_i32, %c0_i32_0 : i32, i32
  }
  func.func @transform_5(%arg0: i32) -> (i32, i32) {
    %c0_i32 = arith.constant 0 : i32
    %c0_i32_0 = arith.constant 0 : i32
    %c0_i32_1 = arith.constant 0 : i32
    return %c0_i32, %c0_i32_0 : i32, i32
  }
  func.func @transform_6(%arg0: i32) -> (i32, i32) {
    %c0_i32 = arith.constant 0 : i32
    %c0_i32_0 = arith.constant 0 : i32
    %c0_i32_1 = arith.constant 0 : i32
    return %c0_i32, %c0_i32_0 : i32, i32
  }
  func.func @transform_7(%arg0: i32) -> (i32, i32) {
    %c0_i32 = arith.constant 0 : i32
    %c0_i32_0 = arith.constant 0 : i32
    %c0_i32_1 = arith.constant 0 : i32
    return %c0_i32, %c0_i32_0 : i32, i32
  }
  func.func @transform_8(%arg0: i32) -> (i32, i32) {
    %c0_i32 = arith.constant 0 : i32
    %c0_i32_0 = arith.constant 0 : i32
    %c0_i32_1 = arith.constant 0 : i32
    return %c0_i32, %c0_i32_0 : i32, i32
  }
  func.func @transform_9(%arg0: i32) -> (i32, i32) {
    %c0_i32 = arith.constant 0 : i32
    %c0_i32_0 = arith.constant 0 : i32
    return %arg0, %c0_i32 : i32, i32
  }
}

</mosaic_0001>

<llo_original>
// kernel: tpu_custom_call.1
$region0: #{tpu_custom_call.1}
  #allocation0 [shape = 'u32[]', space=smem, size = 0x4, offset = 0x4, fixed_abs, tag = 'smem constant byte address 0x4 - core index']
  #allocation1 [shape = 'u32[72,128]{1,0:T(1,128)}', space=vmem, size = 0x9000, scoped, tag = 'internal scratch']
  #allocation2 [shape = 'f32[16,300]{1,0:T(8,128)}', space=vmem, size = 0x6000, scoped, tag = 'scratch operand']
  %s0 = inlined_call_operand.vmem [shape: f32[2,300], index: 0, kind: input, shape index: {}]
  %s1 = inlined_call_operand.vmem [shape: f32[16,64], index: 1, kind: input, shape index: {}]
  %s2 = inlined_call_operand.vmem [shape: bf16[64,300], index: 2, kind: input, shape index: {}]
  %s3 = inlined_call_operand.hbm [shape: bf16[300,300], index: 3, kind: input, shape index: {}]
  %s4 = inlined_call_operand.vmem [shape: f32[1,300], index: 4, kind: input, shape index: {}]
  %s5 = inlined_call_operand.hbm [shape: bf16[300,300], index: 5, kind: input, shape index: {}]
  %s6 = inlined_call_operand.vmem [shape: f32[1,300], index: 6, kind: input, shape index: {}]
  %s7 = inlined_call_operand.vmem [shape: bf16[300,4], index: 7, kind: input, shape index: {}]
  %s8 = inlined_call_operand.vmem [shape: f32[1,4], index: 8, kind: input, shape index: {}]
  %s9 = inlined_call_operand.vmem [shape: f32[16,4], index: 9, kind: output, shape index: {}]
  %s10 = sld [smem:[#allocation0]]
  $region54: #{tpu_custom_call.1} parent=0
    _
  %s12 = ssub.s32 1, %s10
  %s13 = scalar_select 0, %s12, %s10
  $region1: #{tpu_custom_call.1} parent=0
    #allocation3 [shape = 'u8[233472]{0}', space=vmem, size = 0x39000, scoped, tag = 'input window, operand 3, single buffered']
    #allocation4 [shape = 's32[1]{0}', space=sflag, size = 0x4, scoped, tag = 'scoped memory for tpu_custom_call.1']
    #allocation5 [shape = 'u8[233472]{0}', space=vmem, size = 0x39000, scoped, tag = 'input window, operand 5, single buffered']
    #allocation6 [shape = 's32[1]{0}', space=sflag, size = 0x4, scoped, tag = 'scoped memory for tpu_custom_call.1']
    %14 = vsyncpa [#allocation4], 0
    %15 = vsyncpa [#allocation6], 0
    // Predicated region
    $region2: #{tpu_custom_call.1} parent=1 // pred_check
      _
    $region3: #{tpu_custom_call.1} parent=1 // pred_check_branch
      %17 = sbr.rel (0) target = $region5
    $region4: #{tpu_custom_call.1} parent=1 // pred_region
      _
    $region5: #{tpu_custom_call.1} parent=1 // pred_fallthru
      _
    // Predicated region
    $region6: #{tpu_custom_call.1} parent=1 // pred_check
      _
    $region7: #{tpu_custom_call.1} parent=1 // pred_check_branch
      %19 = sbr.rel (0) target = $region9
    $region8: #{tpu_custom_call.1} parent=1 // pred_region
      _
    $region9: #{tpu_custom_call.1} parent=1 // pred_fallthru
      _
    // Predicated region
    $region10: #{tpu_custom_call.1} parent=1 // pred_check
      _
    $region11: #{tpu_custom_call.1} parent=1 // pred_check_branch
      %21 = sbr.rel (0) target = $region13
    $region12: #{tpu_custom_call.1} parent=1 // pred_region
      _
    $region13: #{tpu_custom_call.1} parent=1 // pred_fallthru
      _
    // Predicated region
    $region14: #{tpu_custom_call.1} parent=1 // pred_check
      _
    $region15: #{tpu_custom_call.1} parent=1 // pred_check_branch
      %23 = sbr.rel (0) target = $region17
    $region16: #{tpu_custom_call.1} parent=1 // pred_region
      %25 = vsyncadd [#allocation4], 0
      %s26 = sshll.u32 %s3, 4
      %s27 = int_to_ptr.hbm [resolvable:$true] %s26
      %s28 = sshll.u32 [#allocation3], 4
      %s29 = int_to_ptr.vmem [resolvable:$true] %s28
      %34 = dma.hbm_to_vmem [thread:$0]  %s27, 7296, %s29, [#allocation4], 192, 192, 12
    $region17: #{tpu_custom_call.1} parent=1 // pred_fallthru
      _
    // Predicated region
    $region18: #{tpu_custom_call.1} parent=1 // pred_check
      _
    $region19: #{tpu_custom_call.1} parent=1 // pred_check_branch
      %36 = sbr.rel (0) target = $region21
    $region20: #{tpu_custom_call.1} parent=1 // pred_region
      _
    $region21: #{tpu_custom_call.1} parent=1 // pred_fallthru
      _
    // Predicated region
    $region22: #{tpu_custom_call.1} parent=1 // pred_check
      _
    $region23: #{tpu_custom_call.1} parent=1 // pred_check_branch
      %38 = sbr.rel (0) target = $region25
    $region24: #{tpu_custom_call.1} parent=1 // pred_region
      %40 = vsyncadd [#allocation6], 0
      %s41 = sshll.u32 %s5, 4
      %s42 = int_to_ptr.hbm [resolvable:$true] %s41
      %s43 = sshll.u32 [#allocation5], 4
      %s44 = int_to_ptr.vmem [resolvable:$true] %s43
      %49 = dma.hbm_to_vmem [thread:$0]  %s42, 7296, %s44, [#allocation6], 192, 192, 12
    $region25: #{tpu_custom_call.1} parent=1 // pred_fallthru
      _
    // Predicated region
    $region26: #{tpu_custom_call.1} parent=1 // pred_check
      _
    $region27: #{tpu_custom_call.1} parent=1 // pred_check_branch
      %51 = sbr.rel (0) target = $region29
    $region28: #{tpu_custom_call.1} parent=1 // pred_region
      _
    $region29: #{tpu_custom_call.1} parent=1 // pred_fallthru
      _
    // Predicated region
    $region30: #{tpu_custom_call.1} parent=1 // pred_check
      _
    $region31: #{tpu_custom_call.1} parent=1 // pred_check_branch
      %53 = sbr.rel (0) target = $region33
    $region32: #{tpu_custom_call.1} parent=1 // pred_region
      _
    $region33: #{tpu_custom_call.1} parent=1 // pred_fallthru
      _
    // Predicated region
    $region34: #{tpu_custom_call.1} parent=1 // pred_check
      _
    $region35: #{tpu_custom_call.1} parent=1 // pred_check_branch
      %55 = sbr.rel (0) target = $region37
    $region36: #{tpu_custom_call.1} parent=1 // pred_region
      _
    $region37: #{tpu_custom_call.1} parent=1 // pred_fallthru
      _
    // Predicated region
    $region38: #{tpu_custom_call.1} parent=1 // pred_check
      _
    $region39: #{tpu_custom_call.1} parent=1 // pred_check_branch
      %57 = sbr.rel (0) target = $region41
    $region40: #{tpu_custom_call.1} parent=1 // pred_region
      %59 = dma.done [#allocation4], 7296
    $region41: #{tpu_custom_call.1} parent=1 // pred_fallthru
      _
    // Predicated region
    $region42: #{tpu_custom_call.1} parent=1 // pred_check
      _
    $region43: #{tpu_custom_call.1} parent=1 // pred_check_branch
      %61 = sbr.rel (0) target = $region45
    $region44: #{tpu_custom_call.1} parent=1 // pred_region
      %63 = dma.done [#allocation6], 7296
    $region45: #{tpu_custom_call.1} parent=1 // pred_fallthru
      _
    %v65 = vld [vmem:[%s1] sm:$0xff]
    %v66 = vld [vmem:[%s1 + $0x8] sm:$0xff]
    %v67 = vpack.c.bf16 %v66, %v65
    %v68 = vld [vmem:[%s2] sm:$0xff]
    %v69 = vld [vmem:[%s2 + $0x8] sm:$0xf]
    %v70 = vld [vmem:[%s2 + $0xc] sm:$0xff]
    %v71 = vld [vmem:[%s2 + $0x14] sm:$0xf]
    %v72 = vld [vmem:[%s2 + $0x18] sm:$0xff]
    %v73 = vld [vmem:[%s2 + $0x20] sm:$0xf]
    %v74 = vld [vmem:[%s2 + $0x24] sm:$0xff]
    %v75 = vld [vmem:[%s2 + $0x2c] sm:$0xf]
    %v76 = vld [vmem:[%s2 + $0x30] sm:$0xff]
    %v77 = vld [vmem:[%s2 + $0x38] sm:$0xf]
    %v78 = vld [vmem:[%s2 + $0x3c] sm:$0xff]
    %v79 = vld [vmem:[%s2 + $0x44] sm:$0xf]
    %v80 = vld [vmem:[%s2 + $0x48] sm:$0xff]
    %v81 = vld [vmem:[%s2 + $0x50] sm:$0xf]
    %v82 = vld [vmem:[%s2 + $0x54] sm:$0xff]
    %v83 = vld [vmem:[%s2 + $0x5c] sm:$0xf]
    %v100 = vunpack.c.l.b16 %v68
    %v101 = vunpack.c.h.b16 %v68
    %v102 = vunpack.c.l.b16 %v69
    %v103 = vunpack.c.l.b16 %v70
    %v104 = vunpack.c.h.b16 %v70
    %v105 = vunpack.c.l.b16 %v71
    %v106 = vunpack.c.l.b16 %v72
    %v107 = vunpack.c.h.b16 %v72
    %v108 = vunpack.c.l.b16 %v73
    %v109 = vunpack.c.l.b16 %v74
    %v110 = vunpack.c.h.b16 %v74
    %v111 = vunpack.c.l.b16 %v75
    %v112 = vunpack.c.l.b16 %v76
    %v113 = vunpack.c.h.b16 %v76
    %v114 = vunpack.c.l.b16 %v77
    %v115 = vunpack.c.l.b16 %v78
    %v116 = vunpack.c.h.b16 %v78
    %v117 = vunpack.c.l.b16 %v79
    %v118 = vunpack.c.l.b16 %v80
    %v119 = vunpack.c.h.b16 %v80
    %v120 = vunpack.c.l.b16 %v81
    %v121 = vunpack.c.l.b16 %v82
    %v122 = vunpack.c.h.b16 %v82
    %v123 = vunpack.c.l.b16 %v83
    %v124 = vpack.c.b16 %v103, %v100
    %v125 = vpack.c.b16 %v104, %v101
    %v126 = vpack.c.b16 %v105, %v102
    %v127 = vpack.c.b16 %v109, %v106
    %v128 = vpack.c.b16 %v110, %v107
    %v129 = vpack.c.b16 %v111, %v108
    %v130 = vpack.c.b16 %v115, %v112
    %v131 = vpack.c.b16 %v116, %v113
    %v132 = vpack.c.b16 %v117, %v114
    %v133 = vpack.c.b16 %v121, %v118
    %v134 = vpack.c.b16 %v122, %v119
    %v135 = vpack.c.b16 %v123, %v120
    %vm148 = vcmask 523264
    %v150 = vsel %vm148, %v67, 0
    %152 = vmatpush.bf16.msra.mxu0 0
    %153 = vmatpush.bf16.msra.mxu0 0
    %154 = vmatpush.bf16.msra.mxu0 0
    %155 = vmatpush.bf16.msra.mxu0 0
    %156 = vmatpush.bf16.msra.mxu0 %v133
    %157 = vmatpush.bf16.msra.mxu0 %v130
    %158 = vmatpush.bf16.msra.mxu0 %v127
    %159 = vmatpush.bf16.msra.mxu0 %v124
    %160 = vmatmul.bf16.gmra.mxu0 %v150
    %v161 = vpop.f32.mrf.mxu0
    %v162 = vadd.f32 0.0, %v161
    %v163 = vpop.f32.mrf.mxu0
    %v164 = vadd.f32 0.0, %v163
    %165 = vdwg.mxu0
    %166 = vmatpush.bf16.msra.mxu0 0
    %167 = vmatpush.bf16.msra.mxu0 0
    %168 = vmatpush.bf16.msra.mxu0 0
    %169 = vmatpush.bf16.msra.mxu0 0
    %170 = vmatpush.bf16.msra.mxu0 %v134
    %171 = vmatpush.bf16.msra.mxu0 %v131
    %172 = vmatpush.bf16.msra.mxu0 %v128
    %173 = vmatpush.bf16.msra.mxu0 %v125
    %174 = vmatmul.bf16.gmra.mxu0 %v150
    %v175 = vpop.f32.mrf.mxu0
    %v176 = vadd.f32 0.0, %v175
    %v177 = vpop.f32.mrf.mxu0
    %v178 = vadd.f32 0.0, %v177
    %179 = vdwg.mxu0
    %180 = vmatpush.bf16.msra.mxu0 0
    %181 = vmatpush.bf16.msra.mxu0 0
    %182 = vmatpush.bf16.msra.mxu0 0
    %183 = vmatpush.bf16.msra.mxu0 0
    %184 = vmatpush.bf16.msra.mxu0 %v135
    %185 = vmatpush.bf16.msra.mxu0 %v132
    %186 = vmatpush.bf16.msra.mxu0 %v129
    %187 = vmatpush.bf16.msra.mxu0 %v126
    %188 = vmatmul.bf16.gmra.mxu0 %v150
    %v189 = vpop.f32.mrf.mxu0
    %v190 = vadd.f32 0.0, %v189
    %v191 = vpop.f32.mrf.mxu0
    %v192 = vadd.f32 0.0, %v191
    %193 = vdwg.mxu0
    %194 = vst [vmem:[#allocation2] sm:$0xff] %v162
    %195 = vst [vmem:[#allocation2 + $0x8] sm:$0xff] %v176
    %vm196 = vcmask 359424
    %197 = vst.msk [vmem:[#allocation2 + $0x10] sm:$0xff] %vm196, %v190
    %198 = vst [vmem:[#allocation2 + $0x18] sm:$0xff] %v164
    %199 = vst [vmem:[#allocation2 + $0x20] sm:$0xff] %v178
    %200 = vst.msk [vmem:[#allocation2 + $0x28] sm:$0xff] %vm196, %v192
    %v201 = vld [vmem:[#allocation2] sm:$0xff]
    %v202 = vld [vmem:[#allocation2 + $0x8] sm:$0xff]
    %v203 = vld [vmem:[#allocation2 + $0x10] sm:$0xff]
    %v204 = vld [vmem:[%s0] ss:$2 sm:$0x7]
    %v206 = vperm.slane %v204, 0
    %v207 = vperm.slane %v204, 1
    %v208 = vperm.slane %v204, 2
    %v212 = vadd.f32 %v201, %v206
    %v213 = vadd.f32 %v202, %v207
    %v214 = vadd.f32 %v203, %v208
    %215 = vst [vmem:[#allocation2] sm:$0xff] %v212
    %216 = vst [vmem:[#allocation2 + $0x8] sm:$0xff] %v213
    %217 = vst.msk [vmem:[#allocation2 + $0x10] sm:$0xff] %vm196, %v214
    %v218 = vld [vmem:[#allocation2 + $0x18] sm:$0xff]
    %v219 = vld [vmem:[#allocation2 + $0x20] sm:$0xff]
    %v220 = vld [vmem:[#allocation2 + $0x28] sm:$0xff]
    %s221 = scalar_lea.vmem %s0, 1
    %v222 = vld [vmem:[%s221] ss:$2 sm:$0x7]
    %v224 = vperm.slane %v222, 0
    %v225 = vperm.slane %v222, 1
    %v226 = vperm.slane %v222, 2
    %v230 = vadd.f32 %v218, %v224
    %v231 = vadd.f32 %v219, %v225
    %v232 = vadd.f32 %v220, %v226
    %233 = vst [vmem:[#allocation2 + $0x18] sm:$0xff] %v230
    %234 = vst [vmem:[#allocation2 + $0x20] sm:$0xff] %v231
    %235 = vst.msk [vmem:[#allocation2 + $0x28] sm:$0xff] %vm196, %v232
    %v236 = vld [vmem:[#allocation2] sm:$0xff]
    %v237 = vld [vmem:[#allocation2 + $0x8] sm:$0xff]
    %v238 = vld [vmem:[#allocation2 + $0x10] sm:$0xff]
    %v239 = vld [vmem:[#allocation2 + $0x18] sm:$0xff]
    %v240 = vld [vmem:[#allocation2 + $0x20] sm:$0xff]
    %v241 = vld [vmem:[#allocation2 + $0x28] sm:$0xff]
    %v242 = vpack.c.bf16 %v237, %v236
    %v243 = vpack.c.bf16 %v238, %v238
    %v244 = vpack.c.bf16 %v240, %v239
    %v245 = vpack.c.bf16 %v241, %v241
    %v246 = vunpack.c.l.bf16 %v242
    %v247 = vunpack.c.h.bf16 %v242
    %v248 = vunpack.c.l.bf16 %v243
    %v249 = vunpack.c.l.bf16 %v244
    %v250 = vunpack.c.h.bf16 %v244
    %v251 = vunpack.c.l.bf16 %v245
    %v252 = vmax.f32 %v246, 0.0
    %v253 = vmax.f32 %v247, 0.0
    %v254 = vmax.f32 %v248, 0.0
    %v255 = vmax.f32 %v249, 0.0
    %v256 = vmax.f32 %v250, 0.0
    %v257 = vmax.f32 %v251, 0.0
    %v258 = vpack.c.bf16 %v255, %v252
    %v259 = vpack.c.bf16 %v256, %v253
    %v260 = vpack.c.bf16 %v257, %v254
    %v261 = vld [vmem:[#allocation3] sm:$0xff]
    %v262 = vld [vmem:[#allocation3 + $0x8] sm:$0xf]
    %v263 = vld [vmem:[#allocation3 + $0xc] sm:$0xff]
    %v264 = vld [vmem:[#allocation3 + $0x14] sm:$0xf]
    %v265 = vld [vmem:[#allocation3 + $0x18] sm:$0xff]
    %v266 = vld [vmem:[#allocation3 + $0x20] sm:$0xf]
    %v267 = vld [vmem:[#allocation3 + $0x24] sm:$0xff]
    %v268 = vld [vmem:[#allocation3 + $0x2c] sm:$0xf]
    %v269 = vld [vmem:[#allocation3 + $0x30] sm:$0xff]
    %v270 = vld [vmem:[#allocation3 + $0x38] sm:$0xf]
    %v271 = vld [vmem:[#allocation3 + $0x3c] sm:$0xff]
    %v272 = vld [vmem:[#allocation3 + $0x44] sm:$0xf]
    %v273 = vld [vmem:[#allocation3 + $0x48] sm:$0xff]
    %v274 = vld [vmem:[#allocation3 + $0x50] sm:$0xf]
    %v275 = vld [vmem:[#allocation3 + $0x54] sm:$0xff]
    %v276 = vld [vmem:[#allocation3 + $0x5c] sm:$0xf]
    %v277 = vld [vmem:[#allocation3 + $0x60] sm:$0xff]
    %v278 = vld [vmem:[#allocation3 + $0x68] sm:$0xf]
    %v279 = vld [vmem:[#allocation3 + $0x6c] sm:$0xff]
    %v280 = vld [vmem:[#allocation3 + $0x74] sm:$0xf]
    %v281 = vld [vmem:[#allocation3 + $0x78] sm:$0xff]
    %v282 = vld [vmem:[#allocation3 + $0x80] sm:$0xf]
    %v283 = vld [vmem:[#allocation3 + $0x84] sm:$0xff]
    %v284 = vld [vmem:[#allocation3 + $0x8c] sm:$0xf]
    %v285 = vld [vmem:[#allocation3 + $0x90] sm:$0xff]
    %v286 = vld [vmem:[#allocation3 + $0x98] sm:$0xf]
    %v287 = vld [vmem:[#allocation3 + $0x9c] sm:$0xff]
    %v288 = vld [vmem:[#allocation3 + $0xa4] sm:$0xf]
    %v289 = vld [vmem:[#allocation3 + $0xa8] sm:$0xff]
    %v290 = vld [vmem:[#allocation3 + $0xb0] sm:$0xf]
    %v291 = vld [vmem:[#allocation3 + $0xb4] sm:$0xff]
    %v292 = vld [vmem:[#allocation3 + $0xbc] sm:$0xf]
    %v293 = vld [vmem:[#allocation3 + $0xc0] sm:$0xff]
    %v294 = vld [vmem:[#allocation3 + $0xc8] sm:$0xf]
    %v295 = vld [vmem:[#allocation3 + $0xcc] sm:$0xff]
    %v296 = vld [vmem:[#allocation3 + $0xd4] sm:$0xf]
    %v297 = vld [vmem:[#allocation3 + $0xd8] sm:$0xff]
    %v298 = vld [vmem:[#allocation3 + $0xe0] sm:$0xf]
    %v299 = vld [vmem:[#allocation3 + $0xe4] sm:$0xff]
    %v300 = vld [vmem:[#allocation3 + $0xec] sm:$0xf]
    %v301 = vld [vmem:[#allocation3 + $0xf0] sm:$0xff]
    %v302 = vld [vmem:[#allocation3 + $0xf8] sm:$0xf]
    %v303 = vld [vmem:[#allocation3 + $0xfc] sm:$0xff]
    %v304 = vld [vmem:[#allocation3 + $0x104] sm:$0xf]
    %v305 = vld [vmem:[#allocation3 + $0x108] sm:$0xff]
    %v306 = vld [vmem:[#allocation3 + $0x110] sm:$0xf]
    %v307 = vld [vmem:[#allocation3 + $0x114] sm:$0xff]
    %v308 = vld [vmem:[#allocation3 + $0x11c] sm:$0xf]
    %v309 = vld [vmem:[#allocation3 + $0x120] sm:$0xff]
    %v310 = vld [vmem:[#allocation3 + $0x128] sm:$0xf]
    %v311 = vld [vmem:[#allocation3 + $0x12c] sm:$0xff]
    %v312 = vld [vmem:[#allocation3 + $0x134] sm:$0xf]
    %v313 = vld [vmem:[#allocation3 + $0x138] sm:$0xff]
    %v314 = vld [vmem:[#allocation3 + $0x140] sm:$0xf]
    %v315 = vld [vmem:[#allocation3 + $0x144] sm:$0xff]
    %v316 = vld [vmem:[#allocation3 + $0x14c] sm:$0xf]
    %v317 = vld [vmem:[#allocation3 + $0x150] sm:$0xff]
    %v318 = vld [vmem:[#allocation3 + $0x158] sm:$0xf]
    %v319 = vld [vmem:[#allocation3 + $0x15c] sm:$0xff]
    %v320 = vld [vmem:[#allocation3 + $0x164] sm:$0xf]
    %v321 = vld [vmem:[#allocation3 + $0x168] sm:$0xff]
    %v322 = vld [vmem:[#allocation3 + $0x170] sm:$0xf]
    %v323 = vld [vmem:[#allocation3 + $0x174] sm:$0xff]
    %v324 = vld [vmem:[#allocation3 + $0x17c] sm:$0xf]
    %v325 = vld [vmem:[#allocation3 + $0x180] sm:$0xff]
    %v326 = vld [vmem:[#allocation3 + $0x188] sm:$0xf]
    %v327 = vld [vmem:[#allocation3 + $0x18c] sm:$0xff]
    %v328 = vld [vmem:[#allocation3 + $0x194] sm:$0xf]
    %v329 = vld [vmem:[#allocation3 + $0x198] sm:$0xff]
    %v330 = vld [vmem:[#allocation3 + $0x1a0] sm:$0xf]
    %v331 = vld [vmem:[#allocation3 + $0x1a4] sm:$0xff]
    %v332 = vld [vmem:[#allocation3 + $0x1ac] sm:$0xf]
    %v333 = vld [vmem:[#allocation3 + $0x1b0] sm:$0xff]
    %v334 = vld [vmem:[#allocation3 + $0x1b8] sm:$0xf]
    %v335 = vld [vmem:[#allocation3 + $0x1bc] sm:$0x33]
    %v336 = vld [vmem:[#allocation3 + $0x1c4] sm:$0x3]
    %v337 = vld [vmem:[%s4] sm:$0x7]
    %v339 = vperm.slane %v337, 0
    %v340 = vperm.slane %v337, 1
    %v341 = vperm.slane %v337, 2
    %v421 = vunpack.c.l.b16 %v261
    %v422 = vunpack.c.h.b16 %v261
    %v423 = vunpack.c.l.b16 %v262
    %v424 = vunpack.c.l.b16 %v263
    %v425 = vunpack.c.h.b16 %v263
    %v426 = vunpack.c.l.b16 %v264
    %v427 = vunpack.c.l.b16 %v265
    %v428 = vunpack.c.h.b16 %v265
    %v429 = vunpack.c.l.b16 %v266
    %v430 = vunpack.c.l.b16 %v267
    %v431 = vunpack.c.h.b16 %v267
    %v432 = vunpack.c.l.b16 %v268
    %v433 = vunpack.c.l.b16 %v269
    %v434 = vunpack.c.h.b16 %v269
    %v435 = vunpack.c.l.b16 %v270
    %v436 = vunpack.c.l.b16 %v271
    %v437 = vunpack.c.h.b16 %v271
    %v438 = vunpack.c.l.b16 %v272
    %v439 = vunpack.c.l.b16 %v273
    %v440 = vunpack.c.h.b16 %v273
    %v441 = vunpack.c.l.b16 %v274
    %v442 = vunpack.c.l.b16 %v275
    %v443 = vunpack.c.h.b16 %v275
    %v444 = vunpack.c.l.b16 %v276
    %v445 = vunpack.c.l.b16 %v277
    %v446 = vunpack.c.h.b16 %v277
    %v447 = vunpack.c.l.b16 %v278
    %v448 = vunpack.c.l.b16 %v279
    %v449 = vunpack.c.h.b16 %v279
    %v450 = vunpack.c.l.b16 %v280
    %v451 = vunpack.c.l.b16 %v281
    %v452 = vunpack.c.h.b16 %v281
    %v453 = vunpack.c.l.b16 %v282
    %v454 = vunpack.c.l.b16 %v283
    %v455 = vunpack.c.h.b16 %v283
    %v456 = vunpack.c.l.b16 %v284
    %v457 = vunpack.c.l.b16 %v285
    %v458 = vunpack.c.h.b16 %v285
    %v459 = vunpack.c.l.b16 %v286
    %v460 = vunpack.c.l.b16 %v287
    %v461 = vunpack.c.h.b16 %v287
    %v462 = vunpack.c.l.b16 %v288
    %v463 = vunpack.c.l.b16 %v289
    %v464 = vunpack.c.h.b16 %v289
    %v465 = vunpack.c.l.b16 %v290
    %v466 = vunpack.c.l.b16 %v291
    %v467 = vunpack.c.h.b16 %v291
    %v468 = vunpack.c.l.b16 %v292
    %v469 = vunpack.c.l.b16 %v293
    %v470 = vunpack.c.h.b16 %v293
    %v471 = vunpack.c.l.b16 %v294
    %v472 = vunpack.c.l.b16 %v295
    %v473 = vunpack.c.h.b16 %v295
    %v474 = vunpack.c.l.b16 %v296
    %v475 = vunpack.c.l.b16 %v297
    %v476 = vunpack.c.h.b16 %v297
    %v477 = vunpack.c.l.b16 %v298
    %v478 = vunpack.c.l.b16 %v299
    %v479 = vunpack.c.h.b16 %v299
    %v480 = vunpack.c.l.b16 %v300
    %v481 = vunpack.c.l.b16 %v301
    %v482 = vunpack.c.h.b16 %v301
    %v483 = vunpack.c.l.b16 %v302
    %v484 = vunpack.c.l.b16 %v303
    %v485 = vunpack.c.h.b16 %v303
    %v486 = vunpack.c.l.b16 %v304
    %v487 = vunpack.c.l.b16 %v305
    %v488 = vunpack.c.h.b16 %v305
    %v489 = vunpack.c.l.b16 %v306
    %v490 = vunpack.c.l.b16 %v307
    %v491 = vunpack.c.h.b16 %v307
    %v492 = vunpack.c.l.b16 %v308
    %v493 = vunpack.c.l.b16 %v309
    %v494 = vunpack.c.h.b16 %v309
    %v495 = vunpack.c.l.b16 %v310
    %v496 = vunpack.c.l.b16 %v311
    %v497 = vunpack.c.h.b16 %v311
    %v498 = vunpack.c.l.b16 %v312
    %v499 = vunpack.c.l.b16 %v313
    %v500 = vunpack.c.h.b16 %v313
    %v501 = vunpack.c.l.b16 %v314
    %v502 = vunpack.c.l.b16 %v315
    %v503 = vunpack.c.h.b16 %v315
    %v504 = vunpack.c.l.b16 %v316
    %v505 = vunpack.c.l.b16 %v317
    %v506 = vunpack.c.h.b16 %v317
    %v507 = vunpack.c.l.b16 %v318
    %v508 = vunpack.c.l.b16 %v319
    %v509 = vunpack.c.h.b16 %v319
    %v510 = vunpack.c.l.b16 %v320
    %v511 = vunpack.c.l.b16 %v321
    %v512 = vunpack.c.h.b16 %v321
    %v513 = vunpack.c.l.b16 %v322
    %v514 = vunpack.c.l.b16 %v323
    %v515 = vunpack.c.h.b16 %v323
    %v516 = vunpack.c.l.b16 %v324
    %v517 = vunpack.c.l.b16 %v325
    %v518 = vunpack.c.h.b16 %v325
    %v519 = vunpack.c.l.b16 %v326
    %v520 = vunpack.c.l.b16 %v327
    %v521 = vunpack.c.h.b16 %v327
    %v522 = vunpack.c.l.b16 %v328
    %v523 = vunpack.c.l.b16 %v329
    %v524 = vunpack.c.h.b16 %v329
    %v525 = vunpack.c.l.b16 %v330
    %v526 = vunpack.c.l.b16 %v331
    %v527 = vunpack.c.h.b16 %v331
    %v528 = vunpack.c.l.b16 %v332
    %v529 = vunpack.c.l.b16 %v333
    %v530 = vunpack.c.h.b16 %v333
    %v531 = vunpack.c.l.b16 %v334
    %v532 = vunpack.c.l.b16 %v335
    %v533 = vunpack.c.h.b16 %v335
    %v534 = vunpack.c.l.b16 %v336
    %v535 = vpack.c.b16 %v424, %v421
    %v536 = vpack.c.b16 %v425, %v422
    %v537 = vpack.c.b16 %v426, %v423
    %v538 = vpack.c.b16 %v430, %v427
    %v539 = vpack.c.b16 %v431, %v428
    %v540 = vpack.c.b16 %v432, %v429
    %v541 = vpack.c.b16 %v436, %v433
    %v542 = vpack.c.b16 %v437, %v434
    %v543 = vpack.c.b16 %v438, %v435
    %v544 = vpack.c.b16 %v442, %v439
    %v545 = vpack.c.b16 %v443, %v440
    %v546 = vpack.c.b16 %v444, %v441
    %v547 = vpack.c.b16 %v448, %v445
    %v548 = vpack.c.b16 %v449, %v446
    %v549 = vpack.c.b16 %v450, %v447
    %v550 = vpack.c.b16 %v454, %v451
    %v551 = vpack.c.b16 %v455, %v452
    %v552 = vpack.c.b16 %v456, %v453
    %v553 = vpack.c.b16 %v460, %v457
    %v554 = vpack.c.b16 %v461, %v458
    %v555 = vpack.c.b16 %v462, %v459
    %v556 = vpack.c.b16 %v466, %v463
    %v557 = vpack.c.b16 %v467, %v464
    %v558 = vpack.c.b16 %v468, %v465
    %v559 = vpack.c.b16 %v472, %v469
    %v560 = vpack.c.b16 %v473, %v470
    %v561 = vpack.c.b16 %v474, %v471
    %v562 = vpack.c.b16 %v478, %v475
    %v563 = vpack.c.b16 %v479, %v476
    %v564 = vpack.c.b16 %v480, %v477
    %v565 = vpack.c.b16 %v484, %v481
    %v566 = vpack.c.b16 %v485, %v482
    %v567 = vpack.c.b16 %v486, %v483
    %v568 = vpack.c.b16 %v490, %v487
    %v569 = vpack.c.b16 %v491, %v488
    %v570 = vpack.c.b16 %v492, %v489
    %v571 = vpack.c.b16 %v496, %v493
    %v572 = vpack.c.b16 %v497, %v494
    %v573 = vpack.c.b16 %v498, %v495
    %v574 = vpack.c.b16 %v502, %v499
    %v575 = vpack.c.b16 %v503, %v500
    %v576 = vpack.c.b16 %v504, %v501
    %v577 = vpack.c.b16 %v508, %v505
    %v578 = vpack.c.b16 %v509, %v506
    %v579 = vpack.c.b16 %v510, %v507
    %v580 = vpack.c.b16 %v514, %v511
    %v581 = vpack.c.b16 %v515, %v512
    %v582 = vpack.c.b16 %v516, %v513
    %v583 = vpack.c.b16 %v520, %v517
    %v584 = vpack.c.b16 %v521, %v518
    %v585 = vpack.c.b16 %v522, %v519
    %v586 = vpack.c.b16 %v526, %v523
    %v587 = vpack.c.b16 %v527, %v524
    %v588 = vpack.c.b16 %v528, %v525
    %v589 = vpack.c.b16 %v532, %v529
    %v590 = vpack.c.b16 %v533, %v530
    %v591 = vpack.c.b16 %v534, %v531
    %v647 = vsel %vm196, %v260, 0
    %vm649 = vcmask 1045504
    %v651 = vsel %vm649, %v589, 0
    %v654 = vsel %vm649, %v590, 0
    %v657 = vsel %vm649, %v591, 0
    %659 = vmatpush.bf16.msra.mxu0 %v556
    %660 = vmatpush.bf16.msra.mxu0 %v553
    %661 = vmatpush.bf16.msra.mxu0 %v550
    %662 = vmatpush.bf16.msra.mxu0 %v547
    %663 = vmatpush.bf16.msra.mxu0 %v544
    %664 = vmatpush.bf16.msra.mxu0 %v541
    %665 = vmatpush.bf16.msra.mxu0 %v538
    %666 = vmatpush.bf16.msra.mxu0 %v535
    %667 = vmatmul.bf16.gmra.mxu0 %v258
    %v668 = vpop.f32.mrf.mxu0
    %v669 = vadd.f32 %v339, %v668
    %v670 = vpop.f32.mrf.mxu0
    %v671 = vadd.f32 %v339, %v670
    %672 = vdwg.mxu0
    %673 = vmatpush.bf16.msra.mxu0 %v580
    %674 = vmatpush.bf16.msra.mxu0 %v577
    %675 = vmatpush.bf16.msra.mxu0 %v574
    %676 = vmatpush.bf16.msra.mxu0 %v571
    %677 = vmatpush.bf16.msra.mxu0 %v568
    %678 = vmatpush.bf16.msra.mxu0 %v565
    %679 = vmatpush.bf16.msra.mxu0 %v562
    %680 = vmatpush.bf16.msra.mxu0 %v559
    %681 = vmatmul.bf16.gmra.mxu0 %v259
    %v682 = vpop.f32.mrf.mxu0
    %v683 = vadd.f32 %v669, %v682
    %v684 = vpop.f32.mrf.mxu0
    %v685 = vadd.f32 %v671, %v684
    %686 = vdwg.mxu0
    %687 = vmatpush.bf16.msra.mxu0 0
    %688 = vmatpush.bf16.msra.mxu0 0
    %689 = vmatpush.bf16.msra.mxu0 0
    %690 = vmatpush.bf16.msra.mxu0 0
    %691 = vmatpush.bf16.msra.mxu0 0
    %692 = vmatpush.bf16.msra.mxu0 %v651
    %693 = vmatpush.bf16.msra.mxu0 %v586
    %694 = vmatpush.bf16.msra.mxu0 %v583
    %695 = vmatmul.bf16.gmra.mxu0 %v647
    %v696 = vpop.f32.mrf.mxu0
    %v697 = vadd.f32 %v683, %v696
    %v698 = vpop.f32.mrf.mxu0
    %v699 = vadd.f32 %v685, %v698
    %700 = vdwg.mxu0
    %701 = vmatpush.bf16.msra.mxu0 %v557
    %702 = vmatpush.bf16.msra.mxu0 %v554
    %703 = vmatpush.bf16.msra.mxu0 %v551
    %704 = vmatpush.bf16.msra.mxu0 %v548
    %705 = vmatpush.bf16.msra.mxu0 %v545
    %706 = vmatpush.bf16.msra.mxu0 %v542
    %707 = vmatpush.bf16.msra.mxu0 %v539
    %708 = vmatpush.bf16.msra.mxu0 %v536
    %709 = vmatmul.bf16.gmra.mxu0 %v258
    %v710 = vpop.f32.mrf.mxu0
    %v711 = vadd.f32 %v340, %v710
    %v712 = vpop.f32.mrf.mxu0
    %v713 = vadd.f32 %v340, %v712
    %714 = vdwg.mxu0
    %715 = vmatpush.bf16.msra.mxu0 %v581
    %716 = vmatpush.bf16.msra.mxu0 %v578
    %717 = vmatpush.bf16.msra.mxu0 %v575
    %718 = vmatpush.bf16.msra.mxu0 %v572
    %719 = vmatpush.bf16.msra.mxu0 %v569
    %720 = vmatpush.bf16.msra.mxu0 %v566
    %721 = vmatpush.bf16.msra.mxu0 %v563
    %722 = vmatpush.bf16.msra.mxu0 %v560
    %723 = vmatmul.bf16.gmra.mxu0 %v259
    %v724 = vpop.f32.mrf.mxu0
    %v725 = vadd.f32 %v711, %v724
    %v726 = vpop.f32.mrf.mxu0
    %v727 = vadd.f32 %v713, %v726
    %728 = vdwg.mxu0
    %729 = vmatpush.bf16.msra.mxu0 0
    %730 = vmatpush.bf16.msra.mxu0 0
    %731 = vmatpush.bf16.msra.mxu0 0
    %732 = vmatpush.bf16.msra.mxu0 0
    %733 = vmatpush.bf16.msra.mxu0 0
    %734 = vmatpush.bf16.msra.mxu0 %v654
    %735 = vmatpush.bf16.msra.mxu0 %v587
    %736 = vmatpush.bf16.msra.mxu0 %v584
    %737 = vmatmul.bf16.gmra.mxu0 %v647
    %v738 = vpop.f32.mrf.mxu0
    %v739 = vadd.f32 %v725, %v738
    %v740 = vpop.f32.mrf.mxu0
    %v741 = vadd.f32 %v727, %v740
    %742 = vdwg.mxu0
    %743 = vmatpush.bf16.msra.mxu0 %v558
    %744 = vmatpush.bf16.msra.mxu0 %v555
    %745 = vmatpush.bf16.msra.mxu0 %v552
    %746 = vmatpush.bf16.msra.mxu0 %v549
    %747 = vmatpush.bf16.msra.mxu0 %v546
    %748 = vmatpush.bf16.msra.mxu0 %v543
    %749 = vmatpush.bf16.msra.mxu0 %v540
    %750 = vmatpush.bf16.msra.mxu0 %v537
    %751 = vmatmul.bf16.gmra.mxu0 %v258
    %v752 = vpop.f32.mrf.mxu0
    %v753 = vadd.f32 %v341, %v752
    %v754 = vpop.f32.mrf.mxu0
    %v755 = vadd.f32 %v341, %v754
    %756 = vdwg.mxu0
    %757 = vmatpush.bf16.msra.mxu0 %v582
    %758 = vmatpush.bf16.msra.mxu0 %v579
    %759 = vmatpush.bf16.msra.mxu0 %v576
    %760 = vmatpush.bf16.msra.mxu0 %v573
    %761 = vmatpush.bf16.msra.mxu0 %v570
    %762 = vmatpush.bf16.msra.mxu0 %v567
    %763 = vmatpush.bf16.msra.mxu0 %v564
    %764 = vmatpush.bf16.msra.mxu0 %v561
    %765 = vmatmul.bf16.gmra.mxu0 %v259
    %v766 = vpop.f32.mrf.mxu0
    %v767 = vadd.f32 %v753, %v766
    %v768 = vpop.f32.mrf.mxu0
    %v769 = vadd.f32 %v755, %v768
    %770 = vdwg.mxu0
    %771 = vmatpush.bf16.msra.mxu0 0
    %772 = vmatpush.bf16.msra.mxu0 0
    %773 = vmatpush.bf16.msra.mxu0 0
    %774 = vmatpush.bf16.msra.mxu0 0
    %775 = vmatpush.bf16.msra.mxu0 0
    %776 = vmatpush.bf16.msra.mxu0 %v657
    %777 = vmatpush.bf16.msra.mxu0 %v588
    %778 = vmatpush.bf16.msra.mxu0 %v585
    %779 = vmatmul.bf16.gmra.mxu0 %v647
    %v780 = vpop.f32.mrf.mxu0
    %v781 = vadd.f32 %v767, %v780
    %v782 = vpop.f32.mrf.mxu0
    %v783 = vadd.f32 %v769, %v782
    %784 = vdwg.mxu0
    %v785 = vpack.c.bf16 %v739, %v697
    %v786 = vpack.c.bf16 %v781, %v781
    %v787 = vpack.c.bf16 %v741, %v699
    %v788 = vpack.c.bf16 %v783, %v783
    %v789 = vunpack.c.l.bf16 %v785
    %v790 = vunpack.c.h.bf16 %v785
    %v791 = vunpack.c.l.bf16 %v786
    %v792 = vunpack.c.l.bf16 %v787
    %v793 = vunpack.c.h.bf16 %v787
    %v794 = vunpack.c.l.bf16 %v788
    %v795 = vmax.f32 %v789, 0.0
    %v796 = vmax.f32 %v790, 0.0
    %v797 = vmax.f32 %v791, 0.0
    %v798 = vmax.f32 %v792, 0.0
    %v799 = vmax.f32 %v793, 0.0
    %v800 = vmax.f32 %v794, 0.0
    %v801 = vpack.c.bf16 %v798, %v795
    %v802 = vpack.c.bf16 %v799, %v796
    %v803 = vpack.c.bf16 %v800, %v797
    %v804 = vld [vmem:[#allocation5] sm:$0xff]
    %v805 = vld [vmem:[#allocation5 + $0x8] sm:$0xf]
    %v806 = vld [vmem:[#allocation5 + $0xc] sm:$0xff]
    %v807 = vld [vmem:[#allocation5 + $0x14] sm:$0xf]
    %v808 = vld [vmem:[#allocation5 + $0x18] sm:$0xff]
    %v809 = vld [vmem:[#allocation5 + $0x20] sm:$0xf]
    %v810 = vld [vmem:[#allocation5 + $0x24] sm:$0xff]
    %v811 = vld [vmem:[#allocation5 + $0x2c] sm:$0xf]
    %v812 = vld [vmem:[#allocation5 + $0x30] sm:$0xff]
    %v813 = vld [vmem:[#allocation5 + $0x38] sm:$0xf]
    %v814 = vld [vmem:[#allocation5 + $0x3c] sm:$0xff]
    %v815 = vld [vmem:[#allocation5 + $0x44] sm:$0xf]
    %v816 = vld [vmem:[#allocation5 + $0x48] sm:$0xff]
    %v817 = vld [vmem:[#allocation5 + $0x50] sm:$0xf]
    %v818 = vld [vmem:[#allocation5 + $0x54] sm:$0xff]
    %v819 = vld [vmem:[#allocation5 + $0x5c] sm:$0xf]
    %v820 = vld [vmem:[#allocation5 + $0x60] sm:$0xff]
    %v821 = vld [vmem:[#allocation5 + $0x68] sm:$0xf]
    %v822 = vld [vmem:[#allocation5 + $0x6c] sm:$0xff]
    %v823 = vld [vmem:[#allocation5 + $0x74] sm:$0xf]
    %v824 = vld [vmem:[#allocation5 + $0x78] sm:$0xff]
    %v825 = vld [vmem:[#allocation5 + $0x80] sm:$0xf]
    %v826 = vld [vmem:[#allocation5 + $0x84] sm:$0xff]
    %v827 = vld [vmem:[#allocation5 + $0x8c] sm:$0xf]
    %v828 = vld [vmem:[#allocation5 + $0x90] sm:$0xff]
    %v829 = vld [vmem:[#allocation5 + $0x98] sm:$0xf]
    %v830 = vld [vmem:[#allocation5 + $0x9c] sm:$0xff]
    %v831 = vld [vmem:[#allocation5 + $0xa4] sm:$0xf]
    %v832 = vld [vmem:[#allocation5 + $0xa8] sm:$0xff]
    %v833 = vld [vmem:[#allocation5 + $0xb0] sm:$0xf]
    %v834 = vld [vmem:[#allocation5 + $0xb4] sm:$0xff]
    %v835 = vld [vmem:[#allocation5 + $0xbc] sm:$0xf]
    %v836 = vld [vmem:[#allocation5 + $0xc0] sm:$0xff]
    %v837 = vld [vmem:[#allocation5 + $0xc8] sm:$0xf]
    %v838 = vld [vmem:[#allocation5 + $0xcc] sm:$0xff]
    %v839 = vld [vmem:[#allocation5 + $0xd4] sm:$0xf]
    %v840 = vld [vmem:[#allocation5 + $0xd8] sm:$0xff]
    %v841 = vld [vmem:[#allocation5 + $0xe0] sm:$0xf]
    %v842 = vld [vmem:[#allocation5 + $0xe4] sm:$0xff]
    %v843 = vld [vmem:[#allocation5 + $0xec] sm:$0xf]
    %v844 = vld [vmem:[#allocation5 + $0xf0] sm:$0xff]
    %v845 = vld [vmem:[#allocation5 + $0xf8] sm:$0xf]
    %v846 = vld [vmem:[#allocation5 + $0xfc] sm:$0xff]
    %v847 = vld [vmem:[#allocation5 + $0x104] sm:$0xf]
    %v848 = vld [vmem:[#allocation5 + $0x108] sm:$0xff]
    %v849 = vld [vmem:[#allocation5 + $0x110] sm:$0xf]
    %v850 = vld [vmem:[#allocation5 + $0x114] sm:$0xff]
    %v851 = vld [vmem:[#allocation5 + $0x11c] sm:$0xf]
    %v852 = vld [vmem:[#allocation5 + $0x120] sm:$0xff]
    %v853 = vld [vmem:[#allocation5 + $0x128] sm:$0xf]
    %v854 = vld [vmem:[#allocation5 + $0x12c] sm:$0xff]
    %v855 = vld [vmem:[#allocation5 + $0x134] sm:$0xf]
    %v856 = vld [vmem:[#allocation5 + $0x138] sm:$0xff]
    %v857 = vld [vmem:[#allocation5 + $0x140] sm:$0xf]
    %v858 = vld [vmem:[#allocation5 + $0x144] sm:$0xff]
    %v859 = vld [vmem:[#allocation5 + $0x14c] sm:$0xf]
    %v860 = vld [vmem:[#allocation5 + $0x150] sm:$0xff]
    %v861 = vld [vmem:[#allocation5 + $0x158] sm:$0xf]
    %v862 = vld [vmem:[#allocation5 + $0x15c] sm:$0xff]
    %v863 = vld [vmem:[#allocation5 + $0x164] sm:$0xf]
    %v864 = vld [vmem:[#allocation5 + $0x168] sm:$0xff]
    %v865 = vld [vmem:[#allocation5 + $0x170] sm:$0xf]
    %v866 = vld [vmem:[#allocation5 + $0x174] sm:$0xff]
    %v867 = vld [vmem:[#allocation5 + $0x17c] sm:$0xf]
    %v868 = vld [vmem:[#allocation5 + $0x180] sm:$0xff]
    %v869 = vld [vmem:[#allocation5 + $0x188] sm:$0xf]
    %v870 = vld [vmem:[#allocation5 + $0x18c] sm:$0xff]
    %v871 = vld [vmem:[#allocation5 + $0x194] sm:$0xf]
    %v872 = vld [vmem:[#allocation5 + $0x198] sm:$0xff]
    %v873 = vld [vmem:[#allocation5 + $0x1a0] sm:$0xf]
    %v874 = vld [vmem:[#allocation5 + $0x1a4] sm:$0xff]
    %v875 = vld [vmem:[#allocation5 + $0x1ac] sm:$0xf]
    %v876 = vld [vmem:[#allocation5 + $0x1b0] sm:$0xff]
    %v877 = vld [vmem:[#allocation5 + $0x1b8] sm:$0xf]
    %v878 = vld [vmem:[#allocation5 + $0x1bc] sm:$0x33]
    %v879 = vld [vmem:[#allocation5 + $0x1c4] sm:$0x3]
    %v880 = vld [vmem:[%s6] sm:$0x7]
    %v882 = vperm.slane %v880, 0
    %v883 = vperm.slane %v880, 1
    %v884 = vperm.slane %v880, 2
    %v964 = vunpack.c.l.b16 %v804
    %v965 = vunpack.c.h.b16 %v804
    %v966 = vunpack.c.l.b16 %v805
    %v967 = vunpack.c.l.b16 %v806
    %v968 = vunpack.c.h.b16 %v806
    %v969 = vunpack.c.l.b16 %v807
    %v970 = vunpack.c.l.b16 %v808
    %v971 = vunpack.c.h.b16 %v808
    %v972 = vunpack.c.l.b16 %v809
    %v973 = vunpack.c.l.b16 %v810
    %v974 = vunpack.c.h.b16 %v810
    %v975 = vunpack.c.l.b16 %v811
    %v976 = vunpack.c.l.b16 %v812
    %v977 = vunpack.c.h.b16 %v812
    %v978 = vunpack.c.l.b16 %v813
    %v979 = vunpack.c.l.b16 %v814
    %v980 = vunpack.c.h.b16 %v814
    %v981 = vunpack.c.l.b16 %v815
    %v982 = vunpack.c.l.b16 %v816
    %v983 = vunpack.c.h.b16 %v816
    %v984 = vunpack.c.l.b16 %v817
    %v985 = vunpack.c.l.b16 %v818
    %v986 = vunpack.c.h.b16 %v818
    %v987 = vunpack.c.l.b16 %v819
    %v988 = vunpack.c.l.b16 %v820
    %v989 = vunpack.c.h.b16 %v820
    %v990 = vunpack.c.l.b16 %v821
    %v991 = vunpack.c.l.b16 %v822
    %v992 = vunpack.c.h.b16 %v822
    %v993 = vunpack.c.l.b16 %v823
    %v994 = vunpack.c.l.b16 %v824
    %v995 = vunpack.c.h.b16 %v824
    %v996 = vunpack.c.l.b16 %v825
    %v997 = vunpack.c.l.b16 %v826
    %v998 = vunpack.c.h.b16 %v826
    %v999 = vunpack.c.l.b16 %v827
    %v1000 = vunpack.c.l.b16 %v828
    %v1001 = vunpack.c.h.b16 %v828
    %v1002 = vunpack.c.l.b16 %v829
    %v1003 = vunpack.c.l.b16 %v830
    %v1004 = vunpack.c.h.b16 %v830
    %v1005 = vunpack.c.l.b16 %v831
    %v1006 = vunpack.c.l.b16 %v832
    %v1007 = vunpack.c.h.b16 %v832
    %v1008 = vunpack.c.l.b16 %v833
    %v1009 = vunpack.c.l.b16 %v834
    %v1010 = vunpack.c.h.b16 %v834
    %v1011 = vunpack.c.l.b16 %v835
    %v1012 = vunpack.c.l.b16 %v836
    %v1013 = vunpack.c.h.b16 %v836
    %v1014 = vunpack.c.l.b16 %v837
    %v1015 = vunpack.c.l.b16 %v838
    %v1016 = vunpack.c.h.b16 %v838
    %v1017 = vunpack.c.l.b16 %v839
    %v1018 = vunpack.c.l.b16 %v840
    %v1019 = vunpack.c.h.b16 %v840
    %v1020 = vunpack.c.l.b16 %v841
    %v1021 = vunpack.c.l.b16 %v842
    %v1022 = vunpack.c.h.b16 %v842
    %v1023 = vunpack.c.l.b16 %v843
    %v1024 = vunpack.c.l.b16 %v844
    %v1025 = vunpack.c.h.b16 %v844
    %v1026 = vunpack.c.l.b16 %v845
    %v1027 = vunpack.c.l.b16 %v846
    %v1028 = vunpack.c.h.b16 %v846
    %v1029 = vunpack.c.l.b16 %v847
    %v1030 = vunpack.c.l.b16 %v848
    %v1031 = vunpack.c.h.b16 %v848
    %v1032 = vunpack.c.l.b16 %v849
    %v1033 = vunpack.c.l.b16 %v850
    %v1034 = vunpack.c.h.b16 %v850
    %v1035 = vunpack.c.l.b16 %v851
    %v1036 = vunpack.c.l.b16 %v852
    %v1037 = vunpack.c.h.b16 %v852
    %v1038 = vunpack.c.l.b16 %v853
    %v1039 = vunpack.c.l.b16 %v854
    %v1040 = vunpack.c.h.b16 %v854
    %v1041 = vunpack.c.l.b16 %v855
    %v1042 = vunpack.c.l.b16 %v856
    %v1043 = vunpack.c.h.b16 %v856
    %v1044 = vunpack.c.l.b16 %v857
    %v1045 = vunpack.c.l.b16 %v858
    %v1046 = vunpack.c.h.b16 %v858
    %v1047 = vunpack.c.l.b16 %v859
    %v1048 = vunpack.c.l.b16 %v860
    %v1049 = vunpack.c.h.b16 %v860
    %v1050 = vunpack.c.l.b16 %v861
    %v1051 = vunpack.c.l.b16 %v862
    %v1052 = vunpack.c.h.b16 %v862
    %v1053 = vunpack.c.l.b16 %v863
    %v1054 = vunpack.c.l.b16 %v864
    %v1055 = vunpack.c.h.b16 %v864
    %v1056 = vunpack.c.l.b16 %v865
    %v1057 = vunpack.c.l.b16 %v866
    %v1058 = vunpack.c.h.b16 %v866
    %v1059 = vunpack.c.l.b16 %v867
    %v1060 = vunpack.c.l.b16 %v868
    %v1061 = vunpack.c.h.b16 %v868
    %v1062 = vunpack.c.l.b16 %v869
    %v1063 = vunpack.c.l.b16 %v870
    %v1064 = vunpack.c.h.b16 %v870
    %v1065 = vunpack.c.l.b16 %v871
    %v1066 = vunpack.c.l.b16 %v872
    %v1067 = vunpack.c.h.b16 %v872
    %v1068 = vunpack.c.l.b16 %v873
    %v1069 = vunpack.c.l.b16 %v874
    %v1070 = vunpack.c.h.b16 %v874
    %v1071 = vunpack.c.l.b16 %v875
    %v1072 = vunpack.c.l.b16 %v876
    %v1073 = vunpack.c.h.b16 %v876
    %v1074 = vunpack.c.l.b16 %v877
    %v1075 = vunpack.c.l.b16 %v878
    %v1076 = vunpack.c.h.b16 %v878
    %v1077 = vunpack.c.l.b16 %v879
    %v1078 = vpack.c.b16 %v967, %v964
    %v1079 = vpack.c.b16 %v968, %v965
    %v1080 = vpack.c.b16 %v969, %v966
    %v1081 = vpack.c.b16 %v973, %v970
    %v1082 = vpack.c.b16 %v974, %v971
    %v1083 = vpack.c.b16 %v975, %v972
    %v1084 = vpack.c.b16 %v979, %v976
    %v1085 = vpack.c.b16 %v980, %v977
    %v1086 = vpack.c.b16 %v981, %v978
    %v1087 = vpack.c.b16 %v985, %v982
    %v1088 = vpack.c.b16 %v986, %v983
    %v1089 = vpack.c.b16 %v987, %v984
    %v1090 = vpack.c.b16 %v991, %v988
    %v1091 = vpack.c.b16 %v992, %v989
    %v1092 = vpack.c.b16 %v993, %v990
    %v1093 = vpack.c.b16 %v997, %v994
    %v1094 = vpack.c.b16 %v998, %v995
    %v1095 = vpack.c.b16 %v999, %v996
    %v1096 = vpack.c.b16 %v1003, %v1000
    %v1097 = vpack.c.b16 %v1004, %v1001
    %v1098 = vpack.c.b16 %v1005, %v1002
    %v1099 = vpack.c.b16 %v1009, %v1006
    %v1100 = vpack.c.b16 %v1010, %v1007
    %v1101 = vpack.c.b16 %v1011, %v1008
    %v1102 = vpack.c.b16 %v1015, %v1012
    %v1103 = vpack.c.b16 %v1016, %v1013
    %v1104 = vpack.c.b16 %v1017, %v1014
    %v1105 = vpack.c.b16 %v1021, %v1018
    %v1106 = vpack.c.b16 %v1022, %v1019
    %v1107 = vpack.c.b16 %v1023, %v1020
    %v1108 = vpack.c.b16 %v1027, %v1024
    %v1109 = vpack.c.b16 %v1028, %v1025
    %v1110 = vpack.c.b16 %v1029, %v1026
    %v1111 = vpack.c.b16 %v1033, %v1030
    %v1112 = vpack.c.b16 %v1034, %v1031
    %v1113 = vpack.c.b16 %v1035, %v1032
    %v1114 = vpack.c.b16 %v1039, %v1036
    %v1115 = vpack.c.b16 %v1040, %v1037
    %v1116 = vpack.c.b16 %v1041, %v1038
    %v1117 = vpack.c.b16 %v1045, %v1042
    %v1118 = vpack.c.b16 %v1046, %v1043
    %v1119 = vpack.c.b16 %v1047, %v1044
    %v1120 = vpack.c.b16 %v1051, %v1048
    %v1121 = vpack.c.b16 %v1052, %v1049
    %v1122 = vpack.c.b16 %v1053, %v1050
    %v1123 = vpack.c.b16 %v1057, %v1054
    %v1124 = vpack.c.b16 %v1058, %v1055
    %v1125 = vpack.c.b16 %v1059, %v1056
    %v1126 = vpack.c.b16 %v1063, %v1060
    %v1127 = vpack.c.b16 %v1064, %v1061
    %v1128 = vpack.c.b16 %v1065, %v1062
    %v1129 = vpack.c.b16 %v1069, %v1066
    %v1130 = vpack.c.b16 %v1070, %v1067
    %v1131 = vpack.c.b16 %v1071, %v1068
    %v1132 = vpack.c.b16 %v1075, %v1072
    %v1133 = vpack.c.b16 %v1076, %v1073
    %v1134 = vpack.c.b16 %v1077, %v1074
    %v1190 = vsel %vm196, %v803, 0
    %v1193 = vsel %vm649, %v1132, 0
    %v1196 = vsel %vm649, %v1133, 0
    %v1199 = vsel %vm649, %v1134, 0
    %1201 = vmatpush.bf16.msra.mxu0 %v1099
    %1202 = vmatpush.bf16.msra.mxu0 %v1096
    %1203 = vmatpush.bf16.msra.mxu0 %v1093
    %1204 = vmatpush.bf16.msra.mxu0 %v1090
    %1205 = vmatpush.bf16.msra.mxu0 %v1087
    %1206 = vmatpush.bf16.msra.mxu0 %v1084
    %1207 = vmatpush.bf16.msra.mxu0 %v1081
    %1208 = vmatpush.bf16.msra.mxu0 %v1078
    %1209 = vmatmul.bf16.gmra.mxu0 %v801
    %v1210 = vpop.f32.mrf.mxu0
    %v1211 = vadd.f32 %v882, %v1210
    %v1212 = vpop.f32.mrf.mxu0
    %v1213 = vadd.f32 %v882, %v1212
    %1214 = vdwg.mxu0
    %1215 = vmatpush.bf16.msra.mxu0 %v1123
    %1216 = vmatpush.bf16.msra.mxu0 %v1120
    %1217 = vmatpush.bf16.msra.mxu0 %v1117
    %1218 = vmatpush.bf16.msra.mxu0 %v1114
    %1219 = vmatpush.bf16.msra.mxu0 %v1111
    %1220 = vmatpush.bf16.msra.mxu0 %v1108
    %1221 = vmatpush.bf16.msra.mxu0 %v1105
    %1222 = vmatpush.bf16.msra.mxu0 %v1102
    %1223 = vmatmul.bf16.gmra.mxu0 %v802
    %v1224 = vpop.f32.mrf.mxu0
    %v1225 = vadd.f32 %v1211, %v1224
    %v1226 = vpop.f32.mrf.mxu0
    %v1227 = vadd.f32 %v1213, %v1226
    %1228 = vdwg.mxu0
    %1229 = vmatpush.bf16.msra.mxu0 0
    %1230 = vmatpush.bf16.msra.mxu0 0
    %1231 = vmatpush.bf16.msra.mxu0 0
    %1232 = vmatpush.bf16.msra.mxu0 0
    %1233 = vmatpush.bf16.msra.mxu0 0
    %1234 = vmatpush.bf16.msra.mxu0 %v1193
    %1235 = vmatpush.bf16.msra.mxu0 %v1129
    %1236 = vmatpush.bf16.msra.mxu0 %v1126
    %1237 = vmatmul.bf16.gmra.mxu0 %v1190
    %v1238 = vpop.f32.mrf.mxu0
    %v1239 = vadd.f32 %v1225, %v1238
    %v1240 = vpop.f32.mrf.mxu0
    %v1241 = vadd.f32 %v1227, %v1240
    %1242 = vdwg.mxu0
    %1243 = vmatpush.bf16.msra.mxu0 %v1100
    %1244 = vmatpush.bf16.msra.mxu0 %v1097
    %1245 = vmatpush.bf16.msra.mxu0 %v1094
    %1246 = vmatpush.bf16.msra.mxu0 %v1091
    %1247 = vmatpush.bf16.msra.mxu0 %v1088
    %1248 = vmatpush.bf16.msra.mxu0 %v1085
    %1249 = vmatpush.bf16.msra.mxu0 %v1082
    %1250 = vmatpush.bf16.msra.mxu0 %v1079
    %1251 = vmatmul.bf16.gmra.mxu0 %v801
    %v1252 = vpop.f32.mrf.mxu0
    %v1253 = vadd.f32 %v883, %v1252
    %v1254 = vpop.f32.mrf.mxu0
    %v1255 = vadd.f32 %v883, %v1254
    %1256 = vdwg.mxu0
    %1257 = vmatpush.bf16.msra.mxu0 %v1124
    %1258 = vmatpush.bf16.msra.mxu0 %v1121
    %1259 = vmatpush.bf16.msra.mxu0 %v1118
    %1260 = vmatpush.bf16.msra.mxu0 %v1115
    %1261 = vmatpush.bf16.msra.mxu0 %v1112
    %1262 = vmatpush.bf16.msra.mxu0 %v1109
    %1263 = vmatpush.bf16.msra.mxu0 %v1106
    %1264 = vmatpush.bf16.msra.mxu0 %v1103
    %1265 = vmatmul.bf16.gmra.mxu0 %v802
    %v1266 = vpop.f32.mrf.mxu0
    %v1267 = vadd.f32 %v1253, %v1266
    %v1268 = vpop.f32.mrf.mxu0
    %v1269 = vadd.f32 %v1255, %v1268
    %1270 = vdwg.mxu0
    %1271 = vmatpush.bf16.msra.mxu0 0
    %1272 = vmatpush.bf16.msra.mxu0 0
    %1273 = vmatpush.bf16.msra.mxu0 0
    %1274 = vmatpush.bf16.msra.mxu0 0
    %1275 = vmatpush.bf16.msra.mxu0 0
    %1276 = vmatpush.bf16.msra.mxu0 %v1196
    %1277 = vmatpush.bf16.msra.mxu0 %v1130
    %1278 = vmatpush.bf16.msra.mxu0 %v1127
    %1279 = vmatmul.bf16.gmra.mxu0 %v1190
    %v1280 = vpop.f32.mrf.mxu0
    %v1281 = vadd.f32 %v1267, %v1280
    %v1282 = vpop.f32.mrf.mxu0
    %v1283 = vadd.f32 %v1269, %v1282
    %1284 = vdwg.mxu0
    %1285 = vmatpush.bf16.msra.mxu0 %v1101
    %1286 = vmatpush.bf16.msra.mxu0 %v1098
    %1287 = vmatpush.bf16.msra.mxu0 %v1095
    %1288 = vmatpush.bf16.msra.mxu0 %v1092
    %1289 = vmatpush.bf16.msra.mxu0 %v1089
    %1290 = vmatpush.bf16.msra.mxu0 %v1086
    %1291 = vmatpush.bf16.msra.mxu0 %v1083
    %1292 = vmatpush.bf16.msra.mxu0 %v1080
    %1293 = vmatmul.bf16.gmra.mxu0 %v801
    %v1294 = vpop.f32.mrf.mxu0
    %v1295 = vadd.f32 %v884, %v1294
    %v1296 = vpop.f32.mrf.mxu0
    %v1297 = vadd.f32 %v884, %v1296
    %1298 = vdwg.mxu0
    %1299 = vmatpush.bf16.msra.mxu0 %v1125
    %1300 = vmatpush.bf16.msra.mxu0 %v1122
    %1301 = vmatpush.bf16.msra.mxu0 %v1119
    %1302 = vmatpush.bf16.msra.mxu0 %v1116
    %1303 = vmatpush.bf16.msra.mxu0 %v1113
    %1304 = vmatpush.bf16.msra.mxu0 %v1110
    %1305 = vmatpush.bf16.msra.mxu0 %v1107
    %1306 = vmatpush.bf16.msra.mxu0 %v1104
    %1307 = vmatmul.bf16.gmra.mxu0 %v802
    %v1308 = vpop.f32.mrf.mxu0
    %v1309 = vadd.f32 %v1295, %v1308
    %v1310 = vpop.f32.mrf.mxu0
    %v1311 = vadd.f32 %v1297, %v1310
    %1312 = vdwg.mxu0
    %1313 = vmatpush.bf16.msra.mxu0 0
    %1314 = vmatpush.bf16.msra.mxu0 0
    %1315 = vmatpush.bf16.msra.mxu0 0
    %1316 = vmatpush.bf16.msra.mxu0 0
    %1317 = vmatpush.bf16.msra.mxu0 0
    %1318 = vmatpush.bf16.msra.mxu0 %v1199
    %1319 = vmatpush.bf16.msra.mxu0 %v1131
    %1320 = vmatpush.bf16.msra.mxu0 %v1128
    %1321 = vmatmul.bf16.gmra.mxu0 %v1190
    %v1322 = vpop.f32.mrf.mxu0
    %v1323 = vadd.f32 %v1309, %v1322
    %v1324 = vpop.f32.mrf.mxu0
    %v1325 = vadd.f32 %v1311, %v1324
    %1326 = vdwg.mxu0
    %v1327 = vpack.c.bf16 %v1281, %v1239
    %v1328 = vpack.c.bf16 %v1323, %v1323
    %v1329 = vpack.c.bf16 %v1283, %v1241
    %v1330 = vpack.c.bf16 %v1325, %v1325
    %v1331 = vunpack.c.l.bf16 %v1327
    %v1332 = vunpack.c.h.bf16 %v1327
    %v1333 = vunpack.c.l.bf16 %v1328
    %v1334 = vunpack.c.l.bf16 %v1329
    %v1335 = vunpack.c.h.bf16 %v1329
    %v1336 = vunpack.c.l.bf16 %v1330
    %v1337 = vmax.f32 %v1331, 0.0
    %v1338 = vmax.f32 %v1332, 0.0
    %v1339 = vmax.f32 %v1333, 0.0
    %v1340 = vmax.f32 %v1334, 0.0
    %v1341 = vmax.f32 %v1335, 0.0
    %v1342 = vmax.f32 %v1336, 0.0
    %v1343 = vpack.c.bf16 %v1340, %v1337
    %v1344 = vpack.c.bf16 %v1341, %v1338
    %v1345 = vpack.c.bf16 %v1342, %v1339
    %v1346 = vld [vmem:[%s7] sm:$0xf]
    %v1347 = vld [vmem:[%s7 + $0x4] sm:$0xf]
    %v1348 = vld [vmem:[%s7 + $0x8] sm:$0xf]
    %v1349 = vld [vmem:[%s7 + $0xc] sm:$0xf]
    %v1350 = vld [vmem:[%s7 + $0x10] sm:$0xf]
    %v1351 = vld [vmem:[%s7 + $0x14] sm:$0xf]
    %v1352 = vld [vmem:[%s7 + $0x18] sm:$0xf]
    %v1353 = vld [vmem:[%s7 + $0x1c] sm:$0xf]
    %v1354 = vld [vmem:[%s7 + $0x20] sm:$0xf]
    %v1355 = vld [vmem:[%s7 + $0x24] sm:$0xf]
    %v1356 = vld [vmem:[%s7 + $0x28] sm:$0xf]
    %v1357 = vld [vmem:[%s7 + $0x2c] sm:$0xf]
    %v1358 = vld [vmem:[%s7 + $0x30] sm:$0xf]
    %v1359 = vld [vmem:[%s7 + $0x34] sm:$0xf]
    %v1360 = vld [vmem:[%s7 + $0x38] sm:$0xf]
    %v1361 = vld [vmem:[%s7 + $0x3c] sm:$0xf]
    %v1362 = vld [vmem:[%s7 + $0x40] sm:$0xf]
    %v1363 = vld [vmem:[%s7 + $0x44] sm:$0xf]
    %v1364 = vld [vmem:[%s7 + $0x48] sm:$0xf]
    %v1365 = vld [vmem:[%s7 + $0x4c] sm:$0xf]
    %v1366 = vld [vmem:[%s7 + $0x50] sm:$0xf]
    %v1367 = vld [vmem:[%s7 + $0x54] sm:$0xf]
    %v1368 = vld [vmem:[%s7 + $0x58] sm:$0xf]
    %v1369 = vld [vmem:[%s7 + $0x5c] sm:$0xf]
    %v1370 = vld [vmem:[%s7 + $0x60] sm:$0xf]
    %v1371 = vld [vmem:[%s7 + $0x64] sm:$0xf]
    %v1372 = vld [vmem:[%s7 + $0x68] sm:$0xf]
    %v1373 = vld [vmem:[%s7 + $0x6c] sm:$0xf]
    %v1374 = vld [vmem:[%s7 + $0x70] sm:$0xf]
    %v1375 = vld [vmem:[%s7 + $0x74] sm:$0xf]
    %v1376 = vld [vmem:[%s7 + $0x78] sm:$0xf]
    %v1377 = vld [vmem:[%s7 + $0x7c] sm:$0xf]
    %v1378 = vld [vmem:[%s7 + $0x80] sm:$0xf]
    %v1379 = vld [vmem:[%s7 + $0x84] sm:$0xf]
    %v1380 = vld [vmem:[%s7 + $0x88] sm:$0xf]
    %v1381 = vld [vmem:[%s7 + $0x8c] sm:$0xf]
    %v1382 = vld [vmem:[%s7 + $0x90] sm:$0xf]
    %v1383 = vld [vmem:[%s7 + $0x94] sm:$0x3]
    %v1384 = vld [vmem:[%s8] sm:$0x1]
    %v1386 = vperm.slane %v1384, 0
    %v1426 = vunpack.c.l.b16 %v1346
    %v1427 = vunpack.c.l.b16 %v1347
    %v1428 = vunpack.c.l.b16 %v1348
    %v1429 = vunpack.c.l.b16 %v1349
    %v1430 = vunpack.c.l.b16 %v1350
    %v1431 = vunpack.c.l.b16 %v1351
    %v1432 = vunpack.c.l.b16 %v1352
    %v1433 = vunpack.c.l.b16 %v1353
    %v1434 = vunpack.c.l.b16 %v1354
    %v1435 = vunpack.c.l.b16 %v1355
    %v1436 = vunpack.c.l.b16 %v1356
    %v1437 = vunpack.c.l.b16 %v1357
    %v1438 = vunpack.c.l.b16 %v1358
    %v1439 = vunpack.c.l.b16 %v1359
    %v1440 = vunpack.c.l.b16 %v1360
    %v1441 = vunpack.c.l.b16 %v1361
    %v1442 = vunpack.c.l.b16 %v1362
    %v1443 = vunpack.c.l.b16 %v1363
    %v1444 = vunpack.c.l.b16 %v1364
    %v1445 = vunpack.c.l.b16 %v1365
    %v1446 = vunpack.c.l.b16 %v1366
    %v1447 = vunpack.c.l.b16 %v1367
    %v1448 = vunpack.c.l.b16 %v1368
    %v1449 = vunpack.c.l.b16 %v1369
    %v1450 = vunpack.c.l.b16 %v1370
    %v1451 = vunpack.c.l.b16 %v1371
    %v1452 = vunpack.c.l.b16 %v1372
    %v1453 = vunpack.c.l.b16 %v1373
    %v1454 = vunpack.c.l.b16 %v1374
    %v1455 = vunpack.c.l.b16 %v1375
    %v1456 = vunpack.c.l.b16 %v1376
    %v1457 = vunpack.c.l.b16 %v1377
    %v1458 = vunpack.c.l.b16 %v1378
    %v1459 = vunpack.c.l.b16 %v1379
    %v1460 = vunpack.c.l.b16 %v1380
    %v1461 = vunpack.c.l.b16 %v1381
    %v1462 = vunpack.c.l.b16 %v1382
    %v1463 = vunpack.c.l.b16 %v1383
    %v1464 = vpack.c.b16 %v1427, %v1426
    %v1465 = vpack.c.b16 %v1429, %v1428
    %v1466 = vpack.c.b16 %v1431, %v1430
    %v1467 = vpack.c.b16 %v1433, %v1432
    %v1468 = vpack.c.b16 %v1435, %v1434
    %v1469 = vpack.c.b16 %v1437, %v1436
    %v1470 = vpack.c.b16 %v1439, %v1438
    %v1471 = vpack.c.b16 %v1441, %v1440
    %v1472 = vpack.c.b16 %v1443, %v1442
    %v1473 = vpack.c.b16 %v1445, %v1444
    %v1474 = vpack.c.b16 %v1447, %v1446
    %v1475 = vpack.c.b16 %v1449, %v1448
    %v1476 = vpack.c.b16 %v1451, %v1450
    %v1477 = vpack.c.b16 %v1453, %v1452
    %v1478 = vpack.c.b16 %v1455, %v1454
    %v1479 = vpack.c.b16 %v1457, %v1456
    %v1480 = vpack.c.b16 %v1459, %v1458
    %v1481 = vpack.c.b16 %v1461, %v1460
    %v1482 = vpack.c.b16 %v1463, %v1462
    %v1502 = vsel %vm196, %v1345, 0
    %v1505 = vsel %vm649, %v1482, 0
    %1507 = vmatpush.bf16.msra.mxu0 %v1471
    %1508 = vmatpush.bf16.msra.mxu0 %v1470
    %1509 = vmatpush.bf16.msra.mxu0 %v1469
    %1510 = vmatpush.bf16.msra.mxu0 %v1468
    %1511 = vmatpush.bf16.msra.mxu0 %v1467
    %1512 = vmatpush.bf16.msra.mxu0 %v1466
    %1513 = vmatpush.bf16.msra.mxu0 %v1465
    %1514 = vmatpush.bf16.msra.mxu0 %v1464
    %1515 = vmatmul.bf16.gmra.mxu0 %v1343
    %v1516 = vpop.f32.mrf.mxu0
    %v1517 = vadd.f32 %v1386, %v1516
    %v1518 = vpop.f32.mrf.mxu0
    %v1519 = vadd.f32 %v1386, %v1518
    %1520 = vdwg.mxu0
    %1521 = vmatpush.bf16.msra.mxu0 %v1479
    %1522 = vmatpush.bf16.msra.mxu0 %v1478
    %1523 = vmatpush.bf16.msra.mxu0 %v1477
    %1524 = vmatpush.bf16.msra.mxu0 %v1476
    %1525 = vmatpush.bf16.msra.mxu0 %v1475
    %1526 = vmatpush.bf16.msra.mxu0 %v1474
    %1527 = vmatpush.bf16.msra.mxu0 %v1473
    %1528 = vmatpush.bf16.msra.mxu0 %v1472
    %1529 = vmatmul.bf16.gmra.mxu0 %v1344
    %v1530 = vpop.f32.mrf.mxu0
    %v1531 = vadd.f32 %v1517, %v1530
    %v1532 = vpop.f32.mrf.mxu0
    %v1533 = vadd.f32 %v1519, %v1532
    %1534 = vdwg.mxu0
    %1535 = vmatpush.bf16.msra.mxu0 0
    %1536 = vmatpush.bf16.msra.mxu0 0
    %1537 = vmatpush.bf16.msra.mxu0 0
    %1538 = vmatpush.bf16.msra.mxu0 0
    %1539 = vmatpush.bf16.msra.mxu0 0
    %1540 = vmatpush.bf16.msra.mxu0 %v1505
    %1541 = vmatpush.bf16.msra.mxu0 %v1481
    %1542 = vmatpush.bf16.msra.mxu0 %v1480
    %1543 = vmatmul.bf16.gmra.mxu0 %v1502
    %v1544 = vpop.f32.mrf.mxu0
    %v1545 = vadd.f32 %v1531, %v1544
    %v1546 = vpop.f32.mrf.mxu0
    %v1547 = vadd.f32 %v1533, %v1546
    %1548 = vdwg.mxu0
    %v1549 = vlaneseq
    %v1550 = vand.u32 %v1549, 127
    %vm1551 = vcmp.eq.s32.totalorder %v1550, 0
    %v1552 = vmax.f32 %v1545, 0.0
    %v1553 = vmax.f32 %v1547, 0.0
    %vm1554 = vcmp.ne.f32.partialorder %v1545, %v1545
    %vm1555 = vcmp.ne.f32.partialorder %v1547, %v1547
    %v1556 = vadd.f32 %v1545, 0.0
    %v1557 = vadd.f32 %v1547, 0.0
    %v1558 = vand.u32 2147483647, %v1545
    %v1559 = vand.u32 2147483647, %v1547
    %v1560 = vsub.f32 0.0, %v1558
    %v1561 = vsub.f32 0.0, %v1559
    %v1562 = vmul.f32 %v1560, 1.442695
    %v1563 = vpow.pop %v1562
    %v1564 = vmul.f32 %v1561, 1.442695
    %v1565 = vpow.pop %v1564
    %v1566 = vadd.f32 %v1563, 1.0
    %v1567 = vlog2.pop %v1566
    %v1568 = vmul.f32 %v1567, 0.6931472
    %v1569 = vmul.f32 -0.5, %v1563
    %v1570 = vadd.f32 %v1569, 1.0
    %v1571 = vmul.f32 %v1570, %v1563
    %v1572 = vand.u32 2147483647, %v1563
    %vm1573 = vcmp.lt.f32.partialorder %v1572, 0.0004427343
    %v1574 = vsel %vm1573, %v1571, %v1568
    %v1575 = vadd.f32 %v1565, 1.0
    %v1576 = vlog2.pop %v1575
    %v1577 = vmul.f32 %v1576, 0.6931472
    %v1578 = vmul.f32 -0.5, %v1565
    %v1579 = vadd.f32 %v1578, 1.0
    %v1580 = vmul.f32 %v1579, %v1565
    %v1581 = vand.u32 2147483647, %v1565
    %vm1582 = vcmp.lt.f32.partialorder %v1581, 0.0004427343
    %v1583 = vsel %vm1582, %v1580, %v1577
    %v1584 = vadd.f32 %v1552, %v1574
    %v1585 = vadd.f32 %v1553, %v1583
    %v1586 = vsel %vm1554, %v1556, %v1584
    %v1587 = vsel %vm1555, %v1557, %v1585
    %v1588 = vxor.u32 %v1545, 2147483648
    %v1589 = vxor.u32 %v1547, 2147483648
    %v1590 = vmul.f32 %v1588, 1.442695
    %v1591 = vpow.pop %v1590
    %v1592 = vmul.f32 %v1589, 1.442695
    %v1593 = vpow.pop %v1592
    %v1594 = vadd.f32 %v1591, 1.0
    %v1595 = vadd.f32 %v1593, 1.0
    %v1596 = vrcp.pop %v1594
    %v1597 = vmul.f32 %v1594, %v1596
    %v1598 = vsub.f32 1.0, %v1597
    %v1599 = vmul.f32 %v1596, %v1598
    %v1600 = vadd.f32 %v1596, %v1599
    %vm1601 = vweird.f32 %v1594
    %vm1602 = vweird.f32 %v1596
    %vm1603 = vmor %vm1601, %vm1602
    %v1604 = vsel %vm1603, %v1596, %v1600
    %v1605 = vand.u32 2147483647, %v1594
    %vm1606 = vcmp.eq.f32.partialorder %v1605, 8.507059e+37
    %v1607 = vand.u32 %v1594, 2147483648
    %v1608 = vor.u32 1.1754944e-38, %v1607
    %v1609 = vsel %vm1606, %v1608, %v1604
    %v1610 = vmul.f32 1.0, %v1609
    %v1611 = vrcp.pop %v1595
    %v1612 = vmul.f32 %v1595, %v1611
    %v1613 = vsub.f32 1.0, %v1612
    %v1614 = vmul.f32 %v1611, %v1613
    %v1615 = vadd.f32 %v1611, %v1614
    %vm1616 = vweird.f32 %v1595
    %vm1617 = vweird.f32 %v1611
    %vm1618 = vmor %vm1616, %vm1617
    %v1619 = vsel %vm1618, %v1611, %v1615
    %v1620 = vand.u32 2147483647, %v1595
    %vm1621 = vcmp.eq.f32.partialorder %v1620, 8.507059e+37
    %v1622 = vand.u32 %v1595, 2147483648
    %v1623 = vor.u32 1.1754944e-38, %v1622
    %v1624 = vsel %vm1621, %v1623, %v1619
    %v1625 = vmul.f32 1.0, %v1624
    %v1626 = vsel %vm1551, %v1586, %v1610
    %v1627 = vsel %vm1551, %v1587, %v1625
    %vm1628 = vcmask 31744
    %1629 = vst.msk [vmem:[%s9] sm:$0xff] %vm1628, %v1626
    %1630 = vst.msk [vmem:[%s9 + $0x8] sm:$0xff] %vm1628, %v1627
    // Predicated region
    $region46: #{tpu_custom_call.1} parent=1 // pred_check
      _
    $region47: #{tpu_custom_call.1} parent=1 // pred_check_branch
      %1632 = sbr.rel (0) target = $region49
    $region48: #{tpu_custom_call.1} parent=1 // pred_region
      _
    $region49: #{tpu_custom_call.1} parent=1 // pred_fallthru
      _
    // Predicated region
    $region50: #{tpu_custom_call.1} parent=1 // pred_check
      _
    $region51: #{tpu_custom_call.1} parent=1 // pred_check_branch
      %1634 = sbr.rel (0) target = $region53
    $region52: #{tpu_custom_call.1} parent=1 // pred_region
      _
    $region53: #{tpu_custom_call.1} parent=1 // pred_fallthru
      _
    %1635 = vsyncpa [#allocation4], 1
    %1636 = vsyncpa [#allocation6], 1

</llo_original>
